<compile_context>
chip_gen: v7x
topology: tpu7x:2x2x1
jax: 0.10.0
libtpu: 0.0.40
codegen_flags: <defaults>
</compile_context>

<pallas_src>
import functools
import math

import jax
import jax.numpy as jnp
from jax.experimental import pallas as pl
from jax.experimental.pallas import tpu as pltpu

LANE = 128
_SQRT_2_OVER_PI = math.sqrt(2.0 / math.pi)


def _round_up(n, m):
    return (n + m - 1) // m * m


def _gelu_tanh(v):
    # tanh-approximate GELU: transcendental lands on the EUP slot.
    return 0.5 * v * (1.0 + jnp.tanh(_SQRT_2_OVER_PI * (v + 0.044715 * v * v * v)))


# ----------------------------------------------------------------------------
# Kernel
# ----------------------------------------------------------------------------
def encoder_kernel(x_ref, ln1_g, ln1_b, wqkv, bqkv, wo, bo,
                   ln2_g, ln2_b, w1, b1, w2, b2, out_ref,
                   *, num_heads, head_dim, e_true):
    BB, S, E_pad = x_ref.shape
    inv_n = 1.0 / e_true
    mm_dt = wqkv.dtype                          # bf16 by default, f32 otherwise

    # Mask of real (non-padded) embedding lanes - LayerNorm stats must only
    # see the true E dims.  Padded gamma/beta are zero, so padded output
    # lanes stay exactly 0 through the whole block.
    lane_1e = jax.lax.broadcasted_iota(jnp.int32, (1, E_pad), 1)
    e_mask = (lane_1e < e_true).astype(jnp.float32)

    def layer_norm(v, g, b, eps=1e-5):
        # PyTorch nn.LayerNorm: biased variance, eps inside sqrt.
        mu = jnp.sum(v, axis=-1, keepdims=True) * inv_n
        d = (v - mu) * e_mask                   # zero the padded lanes
        var = jnp.sum(d * d, axis=-1, keepdims=True) * inv_n
        return d * jax.lax.rsqrt(var + eps) * g + b

    x = x_ref[...]                              # (BB, S, E_pad), pad lanes = 0
    xf = x.reshape(BB * S, E_pad)               # tokens-flat (free reshape)

    # ----------------- Multi-head self-attention block (pre-LN) -------------
    h1 = layer_norm(xf, ln1_g[...], ln1_b[...])
    # Fused QKV projection with compact (E_pad, 3*E_pad) weights.  The
    # 1/sqrt(head_dim) scale is already folded into wq / bq.
    qkv = jnp.dot(h1.astype(mm_dt), wqkv[...],
                  preferred_element_type=jnp.float32) + bqkv[...]
    q = qkv[:, 0 * E_pad:1 * E_pad].reshape(BB, S, E_pad)   # 128-aligned slices
    k = qkv[:, 1 * E_pad:2 * E_pad].reshape(BB, S, E_pad)
    v = qkv[:, 2 * E_pad:3 * E_pad].reshape(BB, S, E_pad)

    # One-hot "lane belongs to head h" mask, (H, E_pad).  Built from iota with
    # compares only (no integer division).
    lane = jax.lax.broadcasted_iota(jnp.int32, (num_heads, E_pad), 1)
    hid = jax.lax.broadcasted_iota(jnp.int32, (num_heads, E_pad), 0)
    lo = hid * head_dim
    hmask = ((lane >= lo) & (lane < lo + head_dim)).astype(jnp.float32)

    # Heads-batched attention (no per-head loop, no concat):
    #   qh[b, h*S+q, e] = q[b,q,e] masked to head h's lanes
    #   s [b, h*S+q, k] = sum_e qh * k          (per-head scores)
    qh = (q[:, None, :, :] * hmask[None, :, None, :]
          ).reshape(BB, num_heads * S, E_pad)
    s = jnp.einsum('bme,bke->bmk', qh, k,
                   preferred_element_type=jnp.float32)        # (BB, H*S, S)
    s = s - jnp.max(s, axis=-1, keepdims=True)
    p = jnp.exp(s)
    p = p * pl.reciprocal(jnp.sum(p, axis=-1, keepdims=True), approx=True)
    # Per-head context over the full E_pad lanes, then select each head's own
    # lanes and sum -> compact concatenated-heads layout (BB*S, E_pad).
    o_full = jnp.einsum('bmk,bke->bme', p, v,
                        preferred_element_type=jnp.float32)   # (BB, H*S, E_pad)
    o = (o_full.reshape(BB, num_heads, S, E_pad)
         * hmask[None, :, None, :]).sum(axis=1)               # (BB, S, E_pad)
    o = o.reshape(BB * S, E_pad)

    attn = jnp.dot(o.astype(mm_dt), wo[...],
                   preferred_element_type=jnp.float32) + bo[...]
    # TODO(synk): dropout (attn p=0, mlp p=0.1) treated as eval-mode identity.

    res1 = attn + xf                            # residual 1

    # --------------------------- MLP block (pre-LN) --------------------------
    h2 = layer_norm(res1, ln2_g[...], ln2_b[...])
    z1 = jnp.dot(h2.astype(mm_dt), w1[...],
                 preferred_element_type=jnp.float32) + b1[...]
    z1 = _gelu_tanh(z1)
    z2 = jnp.dot(z1.astype(mm_dt), w2[...],
                 preferred_element_type=jnp.float32) + b2[...]

    out_ref[...] = (z2 + res1).reshape(BB, S, E_pad)   # lane-dense store


# ----------------------------------------------------------------------------
# One-time parameter prep (hoisted out of the per-call path, cached below)
# ----------------------------------------------------------------------------
def _prepare_params(params, num_heads, use_bf16):
    E = params['wq'].shape[0]
    H = num_heads
    hd = E // H
    F = params['w1'].shape[1]
    E_pad = _round_up(E, LANE)
    F_pad = _round_up(F, LANE)
    mm_dt = jnp.bfloat16 if use_bf16 else jnp.float32
    f32 = jnp.float32
    scale = 1.0 / math.sqrt(hd)                 # folded into wq / bq

    def pad2(w, r, c, dt):
        return jnp.zeros((r, c), dt).at[:w.shape[0], :w.shape[1]].set(w.astype(dt))

    def pad_row(vec, c):
        return jnp.zeros((1, c), f32).at[0, :vec.shape[0]].set(vec.astype(f32))

    # Compact fused QKV: (E_pad, 3*E_pad); no per-head 128-lane padding.
    wqkv = jnp.concatenate([pad2(params['wq'] * scale, E_pad, E_pad, mm_dt),
                            pad2(params['wk'], E_pad, E_pad, mm_dt),
                            pad2(params['wv'], E_pad, E_pad, mm_dt)], axis=1)
    bqkv = jnp.concatenate([pad_row(params['bq'] * scale, E_pad),
                            pad_row(params['bk'], E_pad),
                            pad_row(params['bv'], E_pad)], axis=1)

    weights = (
        pad_row(params['ln1_g'], E_pad),        # padded lanes get gamma=0
        pad_row(params['ln1_b'], E_pad),
        wqkv, bqkv,
        pad2(params['wo'], E_pad, E_pad, mm_dt),
        pad_row(params['bo'], E_pad),
        pad_row(params['ln2_g'], E_pad),
        pad_row(params['ln2_b'], E_pad),
        pad2(params['w1'], E_pad, F_pad, mm_dt),
        pad_row(params['b1'], F_pad),
        pad2(params['w2'], F_pad, E_pad, mm_dt),
        pad_row(params['b2'], E_pad),
    )
    return weights, hd, E


def _pick_batch_block(B, S, target_tokens=512):
    # Aim for >=target_tokens tokens per grid step (fills the MXU M dim) but
    # guarantee >=2 grid steps when B>=2 so the "parallel" axis actually
    # shards across the 2 TensorCores on v7x.
    bb = max(1, min(B, target_tokens // max(S, 1)))
    if B >= 2:
        bb = min(bb, max(1, B // 2))
    while B % bb:
        bb -= 1
    return bb


def _vmem_limit_bytes(BB, S, E_pad, F_pad, H, weights):
    # Budget: activation in+out blocks x2 buffers, weights x2 buffers, plus the
    # f32 in-kernel intermediates.  Capped at 48 MiB for v7x's 64 MiB part.
    act_block = BB * S * E_pad * 4
    w_bytes = sum(int(w.size) * w.dtype.itemsize for w in weights)
    scratch = 4 * (3 * BB * S * E_pad            # qkv
                   + 2 * BB * H * S * E_pad      # qh, o_full
                   + 2 * BB * H * S * S          # scores, probs
                   + 2 * BB * S * F_pad          # z1, gelu
                   + 6 * BB * S * E_pad)         # LN / residual temporaries
    est = 4 * act_block + 2 * w_bytes + scratch
    return int(min(max(16 * 1024 * 1024, 2 * est), 48 * 1024 * 1024))


@functools.partial(jax.jit, static_argnames=("num_heads", "head_dim", "e_true"))
def _encoder_forward(x, weights, *, num_heads, head_dim, e_true):
    B, S, E = x.shape
    E_pad = weights[2].shape[0]                  # wqkv rows
    F_pad = weights[8].shape[1]                  # w1 cols

    x_pad = jnp.pad(x.astype(jnp.float32), ((0, 0), (0, 0), (0, E_pad - E)))

    BB = _pick_batch_block(B, S)
    grid = (B // BB,)

    act_spec = pl.BlockSpec((BB, S, E_pad), lambda i: (i, 0, 0))
    w_specs = [pl.BlockSpec(w.shape, lambda i: (0, 0)) for w in weights]

    out_pad = pl.pallas_call(
        functools.partial(encoder_kernel, num_heads=num_heads,
                          head_dim=head_dim, e_true=e_true),
        out_shape=jax.ShapeDtypeStruct((B, S, E_pad), jnp.float32),
        grid=grid,
        in_specs=[act_spec] + w_specs,
        out_specs=act_spec,
        compiler_params=pltpu.CompilerParams(
            dimension_semantics=("parallel",),        # megacore split on v7x
            vmem_limit_bytes=_vmem_limit_bytes(BB, S, E_pad, F_pad,
                                               num_heads, weights)),
    )(x_pad, *weights)

    return out_pad[..., :E]


# Cache keyed on params identity so padding/fusion runs once, not per call.
_PREP_CACHE = {}


def transformer_encoder_block(x, params, num_heads=7, use_bf16=True):
    E = x.shape[-1]
    assert E % num_heads == 0, "Incompatible number of heads"
    key = (id(params), num_heads, use_bf16)
    if key not in _PREP_CACHE:
        _PREP_CACHE[key] = _prepare_params(params, num_heads, use_bf16)
    weights, head_dim, e_true = _PREP_CACHE[key]
    return _encoder_forward(x, weights, num_heads=num_heads,
                            head_dim=head_dim, e_true=e_true)


# ----------------------------------------------------------------------------
# Parameter init + pure-JAX reference (for correctness check)
# ----------------------------------------------------------------------------
def init_params(key, embed_dim=49, expansion_factor=4):
    E = embed_dim
    F = E * expansion_factor
    ks = jax.random.split(key, 6)

    def w(k, shape, fan_in):
        return jax.random.normal(k, shape, jnp.float32) * (1.0 / math.sqrt(fan_in))

    return dict(
        ln1_g=jnp.ones((E,), jnp.float32),
        ln1_b=jnp.zeros((E,), jnp.float32),
        # (in, out) layouts (i.e. PyTorch weight.T)
        wq=w(ks[0], (E, E), E), wk=w(ks[1], (E, E), E), wv=w(ks[2], (E, E), E),
        bq=jnp.zeros((E,), jnp.float32),
        bk=jnp.zeros((E,), jnp.float32),
        bv=jnp.zeros((E,), jnp.float32),
        wo=w(ks[3], (E, E), E),
        bo=jnp.zeros((E,), jnp.float32),
        ln2_g=jnp.ones((E,), jnp.float32),
        ln2_b=jnp.zeros((E,), jnp.float32),
        w1=w(ks[4], (E, F), E),
        b1=0.01 * jnp.ones((F,), jnp.float32),
        w2=w(ks[5], (F, E), F),
        b2=0.01 * jnp.ones((E,), jnp.float32),
    )


def reference_forward(x, params, num_heads):
    B, S, E = x.shape
    hd = E // num_heads

    def ln(v, g, b, eps=1e-5):
        mu = jnp.mean(v, axis=-1, keepdims=True)
        var = jnp.mean((v - mu) ** 2, axis=-1, keepdims=True)
        return (v - mu) * jax.lax.rsqrt(var + eps) * g + b

    h1 = ln(x, params['ln1_g'], params['ln1_b'])
    q = h1 @ params['wq'] + params['bq']
    k = h1 @ params['wk'] + params['bk']
    v = h1 @ params['wv'] + params['bv']

    def split(t):
        return t.reshape(B, S, num_heads, hd).transpose(0, 2, 1, 3)

    qh, kh, vh = split(q), split(k), split(v)
    s = jnp.einsum('bhqd,bhkd->bhqk', qh, kh) / math.sqrt(hd)
    p = jax.nn.softmax(s, axis=-1)
    o = jnp.einsum('bhqk,bhkd->bhqd', p, vh).transpose(0, 2, 1, 3).reshape(B, S, E)
    attn = o @ params['wo'] + params['bo']
    res1 = attn + x

    h2 = ln(res1, params['ln2_g'], params['ln2_b'])
    z1 = h2 @ params['w1'] + params['b1']
    z1 = 0.5 * z1 * (1.0 + jax.lax.erf(z1 / math.sqrt(2.0)))   # exact GELU
    z2 = z1 @ params['w2'] + params['b2']
    return z2 + res1


if __name__ == "__main__":
    key = jax.random.PRNGKey(0)
    kx, kp = jax.random.split(key)

    B, S, E, H = 2, 8, 49, 7          # embedding_dim=49, num_of_heads=7
    x = jax.random.normal(kx, (B, S, E), jnp.float32)
    params = init_params(kp, embed_dim=E, expansion_factor=4)

    ref = reference_forward(x, params, H)

    # Default path: bf16 MXU inputs, f32 accumulation.
    out = transformer_encoder_block(x, params, num_heads=H)
    jax.block_until_ready(out)
    assert out.shape == (B, S, E) and out.dtype == jnp.float32
    assert bool(jnp.all(jnp.isfinite(out)))
    err_bf16 = float(jnp.max(jnp.abs(out - ref)))
    assert err_bf16 < 3e-2, f"bf16-path max abs error {err_bf16}"

    # Strict f32 validation path (approx-reciprocal + tanh-GELU only deltas).
    out_f32 = transformer_encoder_block(x, params, num_heads=H, use_bf16=False)
    jax.block_until_ready(out_f32)
    err_f32 = float(jnp.max(jnp.abs(out_f32 - ref)))
    assert err_f32 < 1e-2, f"f32-path max abs error {err_f32}"

    print("KERNEL_OK")
</pallas_src>

<mosaic_0001>
module attributes {stable_mosaic.version = 11 : i64} {
  func.func @encoder_kernel(%arg0: i32, %arg1: memref<1x8x128xf32, #tpu.memory_space<vmem>>, %arg2: memref<1x128xf32, #tpu.memory_space<vmem>>, %arg3: memref<1x128xf32, #tpu.memory_space<vmem>>, %arg4: memref<128x384xbf16, #tpu.memory_space<vmem>>, %arg5: memref<1x384xf32, #tpu.memory_space<vmem>>, %arg6: memref<128x128xbf16, #tpu.memory_space<vmem>>, %arg7: memref<1x128xf32, #tpu.memory_space<vmem>>, %arg8: memref<1x128xf32, #tpu.memory_space<vmem>>, %arg9: memref<1x128xf32, #tpu.memory_space<vmem>>, %arg10: memref<128x256xbf16, #tpu.memory_space<vmem>>, %arg11: memref<1x256xf32, #tpu.memory_space<vmem>>, %arg12: memref<256x128xbf16, #tpu.memory_space<vmem>>, %arg13: memref<1x128xf32, #tpu.memory_space<vmem>>, %arg14: memref<1x8x128xf32, #tpu.memory_space<vmem>>) attributes {dimension_semantics = [#tpu.dimension_semantics<parallel>], iteration_bounds = array<i64: 2>, scalar_prefetch = 0 : i64, scratch_operands = 0 : i64, tpu.core_type = #tpu.core_type<tc>, window_params = [{transform_indices = @transform_0, window_bounds = array<i64: 1, 8, 128>}, {pipeline_mode = #tpu.pipeline_mode<synchronous>, transform_indices = @transform_1, window_bounds = array<i64: 1, 128>}, {pipeline_mode = #tpu.pipeline_mode<synchronous>, transform_indices = @transform_2, window_bounds = array<i64: 1, 128>}, {pipeline_mode = #tpu.pipeline_mode<synchronous>, transform_indices = @transform_3, window_bounds = array<i64: 128, 384>}, {pipeline_mode = #tpu.pipeline_mode<synchronous>, transform_indices = @transform_4, window_bounds = array<i64: 1, 384>}, {pipeline_mode = #tpu.pipeline_mode<synchronous>, transform_indices = @transform_5, window_bounds = array<i64: 128, 128>}, {pipeline_mode = #tpu.pipeline_mode<synchronous>, transform_indices = @transform_6, window_bounds = array<i64: 1, 128>}, {pipeline_mode = #tpu.pipeline_mode<synchronous>, transform_indices = @transform_7, window_bounds = array<i64: 1, 128>}, {pipeline_mode = #tpu.pipeline_mode<synchronous>, transform_indices = @transform_8, window_bounds = array<i64: 1, 128>}, {pipeline_mode = #tpu.pipeline_mode<synchronous>, transform_indices = @transform_9, window_bounds = array<i64: 128, 256>}, {pipeline_mode = #tpu.pipeline_mode<synchronous>, transform_indices = @transform_10, window_bounds = array<i64: 1, 256>}, {pipeline_mode = #tpu.pipeline_mode<synchronous>, transform_indices = @transform_11, window_bounds = array<i64: 256, 128>}, {pipeline_mode = #tpu.pipeline_mode<synchronous>, transform_indices = @transform_12, window_bounds = array<i64: 1, 128>}, {transform_indices = @transform_13, window_bounds = array<i64: 1, 8, 128>}]} {
    %0 = tpu.iota {dimensions = array<i32: 1>} : vector<1x128xi32>
    %c49_i32 = arith.constant 49 : i32
    %1 = vector.broadcast %c49_i32 : i32 to vector<1x128xi32>
    %2 = arith.cmpi slt, %0, %1 : vector<1x128xi32>
    %3 = arith.extui %2 : vector<1x128xi1> to vector<1x128xi32>
    %4 = arith.sitofp %3 : vector<1x128xi32> to vector<1x128xf32>
    %c0 = arith.constant 0 : index
    %c0_0 = arith.constant 0 : index
    %c0_1 = arith.constant 0 : index
    %5 = vector.load %arg1[%c0, %c0_0, %c0_1] : memref<1x8x128xf32, #tpu.memory_space<vmem>>, vector<1x8x128xf32>
    %6 = vector.shape_cast %5 : vector<1x8x128xf32> to vector<8x128xf32>
    %c0_2 = arith.constant 0 : index
    %c0_3 = arith.constant 0 : index
    %7 = vector.load %arg2[%c0_2, %c0_3] : memref<1x128xf32, #tpu.memory_space<vmem>>, vector<1x128xf32>
    %c0_4 = arith.constant 0 : index
    %c0_5 = arith.constant 0 : index
    %8 = vector.load %arg3[%c0_4, %c0_5] : memref<1x128xf32, #tpu.memory_space<vmem>>, vector<1x128xf32>
    %cst = arith.constant dense<0.000000e+00> : vector<8xf32>
    %9 = vector.multi_reduction <add>, %6, %cst [1] : vector<8x128xf32> to vector<8xf32>
    %10 = vector.shape_cast %9 : vector<8xf32> to vector<8x1xf32>
    %cst_6 = arith.constant 0.0204081628 : f32
    %11 = vector.broadcast %cst_6 : f32 to vector<8x1xf32>
    %12 = arith.mulf %10, %11 : vector<8x1xf32>
    %13 = vector.broadcast %12 : vector<8x1xf32> to vector<8x128xf32>
    %14 = arith.subf %6, %13 : vector<8x128xf32>
    %15 = vector.broadcast %4 : vector<1x128xf32> to vector<8x128xf32>
    %16 = arith.mulf %14, %15 : vector<8x128xf32>
    %17 = arith.mulf %16, %16 : vector<8x128xf32>
    %cst_7 = arith.constant dense<0.000000e+00> : vector<8xf32>
    %18 = vector.multi_reduction <add>, %17, %cst_7 [1] : vector<8x128xf32> to vector<8xf32>
    %19 = vector.shape_cast %18 : vector<8xf32> to vector<8x1xf32>
    %cst_8 = arith.constant 0.0204081628 : f32
    %20 = vector.broadcast %cst_8 : f32 to vector<8x1xf32>
    %21 = arith.mulf %19, %20 : vector<8x1xf32>
    %cst_9 = arith.constant 9.99999974E-6 : f32
    %22 = vector.broadcast %cst_9 : f32 to vector<8x1xf32>
    %23 = arith.addf %21, %22 : vector<8x1xf32>
    %24 = math.rsqrt %23 : vector<8x1xf32>
    %25 = vector.broadcast %24 : vector<8x1xf32> to vector<8x128xf32>
    %26 = arith.mulf %16, %25 : vector<8x128xf32>
    %27 = vector.broadcast %7 : vector<1x128xf32> to vector<8x128xf32>
    %28 = arith.mulf %26, %27 : vector<8x128xf32>
    %29 = vector.broadcast %8 : vector<1x128xf32> to vector<8x128xf32>
    %30 = arith.addf %28, %29 : vector<8x128xf32>
    %31 = arith.truncf %30 : vector<8x128xf32> to vector<8x128xbf16>
    %c0_10 = arith.constant 0 : index
    %c0_11 = arith.constant 0 : index
    %32 = vector.load %arg4[%c0_10, %c0_11] : memref<128x384xbf16, #tpu.memory_space<vmem>>, vector<128x384xbf16>
    %cst_12 = arith.constant dense<0.000000e+00> : vector<8x384xf32>
    %33 = tpu.matmul %31, %32, %cst_12 {dimension_numbers = #tpu.dot_dimension_numbers<[1], [0], [0], [1], [0, 0, 1, 1], [], []>} : vector<8x128xbf16>, vector<128x384xbf16>, vector<8x384xf32> -> vector<8x384xf32>
    %c0_13 = arith.constant 0 : index
    %c0_14 = arith.constant 0 : index
    %34 = vector.load %arg5[%c0_13, %c0_14] : memref<1x384xf32, #tpu.memory_space<vmem>>, vector<1x384xf32>
    %35 = vector.broadcast %34 : vector<1x384xf32> to vector<8x384xf32>
    %36 = arith.addf %33, %35 : vector<8x384xf32>
    %37 = vector.extract_strided_slice %36 {offsets = [0, 0], sizes = [8, 128], strides = [1, 1]} : vector<8x384xf32> to vector<8x128xf32>
    %38 = vector.shape_cast %37 : vector<8x128xf32> to vector<1x8x128xf32>
    %39 = vector.extract_strided_slice %36 {offsets = [0, 128], sizes = [8, 128], strides = [1, 1]} : vector<8x384xf32> to vector<8x128xf32>
    %40 = vector.shape_cast %39 : vector<8x128xf32> to vector<1x8x128xf32>
    %41 = vector.extract_strided_slice %36 {offsets = [0, 256], sizes = [8, 128], strides = [1, 1]} : vector<8x384xf32> to vector<8x128xf32>
    %42 = vector.shape_cast %41 : vector<8x128xf32> to vector<1x8x128xf32>
    %43 = tpu.iota {dimensions = array<i32: 1>} : vector<7x128xi32>
    %44 = tpu.iota {dimensions = array<i32: 0>} : vector<7x128xi32>
    %c7_i32 = arith.constant 7 : i32
    %45 = vector.broadcast %c7_i32 : i32 to vector<7x128xi32>
    %46 = arith.muli %44, %45 : vector<7x128xi32>
    %47 = arith.cmpi sge, %43, %46 : vector<7x128xi32>
    %c7_i32_15 = arith.constant 7 : i32
    %48 = vector.broadcast %c7_i32_15 : i32 to vector<7x128xi32>
    %49 = arith.addi %46, %48 : vector<7x128xi32>
    %50 = arith.cmpi slt, %43, %49 : vector<7x128xi32>
    %51 = arith.andi %47, %50 : vector<7x128xi1>
    %52 = arith.extui %51 : vector<7x128xi1> to vector<7x128xi32>
    %53 = arith.sitofp %52 : vector<7x128xi32> to vector<7x128xf32>
    %54 = vector.shape_cast %38 : vector<1x8x128xf32> to vector<1x1x8x128xf32>
    %55 = vector.shape_cast %53 : vector<7x128xf32> to vector<1x7x1x128xf32>
    %56 = vector.broadcast %54 : vector<1x1x8x128xf32> to vector<1x7x8x128xf32>
    %57 = vector.broadcast %55 : vector<1x7x1x128xf32> to vector<1x7x8x128xf32>
    %58 = arith.mulf %56, %57 : vector<1x7x8x128xf32>
    %59 = vector.shape_cast %58 : vector<1x7x8x128xf32> to vector<1x56x128xf32>
    "tpu.trace_start"() <{level = 10 : i32, message = "bme,bke->bmk"}> : () -> ()
    %cst_16 = arith.constant dense<0.000000e+00> : vector<1x56x8xf32>
    %60 = tpu.matmul %59, %40, %cst_16 {dimension_numbers = #tpu.dot_dimension_numbers<[2], [2], [1], [1], [0, 0, 0, 1, 1, 1], [0], [0]>} : vector<1x56x128xf32>, vector<1x8x128xf32>, vector<1x56x8xf32> -> vector<1x56x8xf32>
    "tpu.trace_stop"() : () -> ()
    %cst_17 = arith.constant dense<0xFF800000> : vector<1x56xf32>
    %61 = vector.multi_reduction <maximumf>, %60, %cst_17 [2] : vector<1x56x8xf32> to vector<1x56xf32>
    %62 = vector.shape_cast %61 : vector<1x56xf32> to vector<1x56x1xf32>
    %63 = vector.broadcast %62 : vector<1x56x1xf32> to vector<1x56x8xf32>
    %64 = arith.subf %60, %63 : vector<1x56x8xf32>
    %65 = math.exp %64 : vector<1x56x8xf32>
    %cst_18 = arith.constant dense<0.000000e+00> : vector<1x56xf32>
    %66 = vector.multi_reduction <add>, %65, %cst_18 [2] : vector<1x56x8xf32> to vector<1x56xf32>
    %67 = vector.shape_cast %66 : vector<1x56xf32> to vector<1x56x1xf32>
    %68 = tpu.reciprocal %67 {approx = true} : vector<1x56x1xf32> -> vector<1x56x1xf32>
    %69 = vector.broadcast %68 : vector<1x56x1xf32> to vector<1x56x8xf32>
    %70 = arith.mulf %65, %69 : vector<1x56x8xf32>
    "tpu.trace_start"() <{level = 10 : i32, message = "bmk,bke->bme"}> : () -> ()
    %cst_19 = arith.constant dense<0.000000e+00> : vector<1x56x128xf32>
    %71 = tpu.matmul %70, %42, %cst_19 {dimension_numbers = #tpu.dot_dimension_numbers<[2], [1], [1], [2], [0, 0, 0, 1, 1, 2], [0], [0]>} : vector<1x56x8xf32>, vector<1x8x128xf32>, vector<1x56x128xf32> -> vector<1x56x128xf32>
    "tpu.trace_stop"() : () -> ()
    %72 = vector.shape_cast %71 : vector<1x56x128xf32> to vector<1x7x8x128xf32>
    %73 = vector.shape_cast %53 : vector<7x128xf32> to vector<1x7x1x128xf32>
    %74 = vector.broadcast %73 : vector<1x7x1x128xf32> to vector<1x7x8x128xf32>
    %75 = arith.mulf %72, %74 : vector<1x7x8x128xf32>
    %cst_20 = arith.constant dense<0.000000e+00> : vector<1x8x128xf32>
    %76 = vector.multi_reduction <add>, %75, %cst_20 [1] : vector<1x7x8x128xf32> to vector<1x8x128xf32>
    %77 = vector.shape_cast %76 : vector<1x8x128xf32> to vector<8x128xf32>
    %78 = arith.truncf %77 : vector<8x128xf32> to vector<8x128xbf16>
    %c0_21 = arith.constant 0 : index
    %c0_22 = arith.constant 0 : index
    %79 = vector.load %arg6[%c0_21, %c0_22] : memref<128x128xbf16, #tpu.memory_space<vmem>>, vector<128x128xbf16>
    %cst_23 = arith.constant dense<0.000000e+00> : vector<8x128xf32>
    %80 = tpu.matmul %78, %79, %cst_23 {dimension_numbers = #tpu.dot_dimension_numbers<[1], [0], [0], [1], [0, 0, 1, 1], [], []>} : vector<8x128xbf16>, vector<128x128xbf16>, vector<8x128xf32> -> vector<8x128xf32>
    %c0_24 = arith.constant 0 : index
    %c0_25 = arith.constant 0 : index
    %81 = vector.load %arg7[%c0_24, %c0_25] : memref<1x128xf32, #tpu.memory_space<vmem>>, vector<1x128xf32>
    %82 = vector.broadcast %81 : vector<1x128xf32> to vector<8x128xf32>
    %83 = arith.addf %80, %82 : vector<8x128xf32>
    %84 = arith.addf %83, %6 : vector<8x128xf32>
    %c0_26 = arith.constant 0 : index
    %c0_27 = arith.constant 0 : index
    %85 = vector.load %arg8[%c0_26, %c0_27] : memref<1x128xf32, #tpu.memory_space<vmem>>, vector<1x128xf32>
    %c0_28 = arith.constant 0 : index
    %c0_29 = arith.constant 0 : index
    %86 = vector.load %arg9[%c0_28, %c0_29] : memref<1x128xf32, #tpu.memory_space<vmem>>, vector<1x128xf32>
    %cst_30 = arith.constant dense<0.000000e+00> : vector<8xf32>
    %87 = vector.multi_reduction <add>, %84, %cst_30 [1] : vector<8x128xf32> to vector<8xf32>
    %88 = vector.shape_cast %87 : vector<8xf32> to vector<8x1xf32>
    %cst_31 = arith.constant 0.0204081628 : f32
    %89 = vector.broadcast %cst_31 : f32 to vector<8x1xf32>
    %90 = arith.mulf %88, %89 : vector<8x1xf32>
    %91 = vector.broadcast %90 : vector<8x1xf32> to vector<8x128xf32>
    %92 = arith.subf %84, %91 : vector<8x128xf32>
    %93 = vector.broadcast %4 : vector<1x128xf32> to vector<8x128xf32>
    %94 = arith.mulf %92, %93 : vector<8x128xf32>
    %95 = arith.mulf %94, %94 : vector<8x128xf32>
    %cst_32 = arith.constant dense<0.000000e+00> : vector<8xf32>
    %96 = vector.multi_reduction <add>, %95, %cst_32 [1] : vector<8x128xf32> to vector<8xf32>
    %97 = vector.shape_cast %96 : vector<8xf32> to vector<8x1xf32>
    %cst_33 = arith.constant 0.0204081628 : f32
    %98 = vector.broadcast %cst_33 : f32 to vector<8x1xf32>
    %99 = arith.mulf %97, %98 : vector<8x1xf32>
    %cst_34 = arith.constant 9.99999974E-6 : f32
    %100 = vector.broadcast %cst_34 : f32 to vector<8x1xf32>
    %101 = arith.addf %99, %100 : vector<8x1xf32>
    %102 = math.rsqrt %101 : vector<8x1xf32>
    %103 = vector.broadcast %102 : vector<8x1xf32> to vector<8x128xf32>
    %104 = arith.mulf %94, %103 : vector<8x128xf32>
    %105 = vector.broadcast %85 : vector<1x128xf32> to vector<8x128xf32>
    %106 = arith.mulf %104, %105 : vector<8x128xf32>
    %107 = vector.broadcast %86 : vector<1x128xf32> to vector<8x128xf32>
    %108 = arith.addf %106, %107 : vector<8x128xf32>
    %109 = arith.truncf %108 : vector<8x128xf32> to vector<8x128xbf16>
    %c0_35 = arith.constant 0 : index
    %c0_36 = arith.constant 0 : index
    %110 = vector.load %arg10[%c0_35, %c0_36] : memref<128x256xbf16, #tpu.memory_space<vmem>>, vector<128x256xbf16>
    %cst_37 = arith.constant dense<0.000000e+00> : vector<8x256xf32>
    %111 = tpu.matmul %109, %110, %cst_37 {dimension_numbers = #tpu.dot_dimension_numbers<[1], [0], [0], [1], [0, 0, 1, 1], [], []>} : vector<8x128xbf16>, vector<128x256xbf16>, vector<8x256xf32> -> vector<8x256xf32>
    %c0_38 = arith.constant 0 : index
    %c0_39 = arith.constant 0 : index
    %112 = vector.load %arg11[%c0_38, %c0_39] : memref<1x256xf32, #tpu.memory_space<vmem>>, vector<1x256xf32>
    %113 = vector.broadcast %112 : vector<1x256xf32> to vector<8x256xf32>
    %114 = arith.addf %111, %113 : vector<8x256xf32>
    %cst_40 = arith.constant 5.000000e-01 : f32
    %115 = vector.broadcast %cst_40 : f32 to vector<8x256xf32>
    %116 = arith.mulf %115, %114 : vector<8x256xf32>
    %cst_41 = arith.constant 4.471500e-02 : f32
    %117 = vector.broadcast %cst_41 : f32 to vector<8x256xf32>
    %118 = arith.mulf %117, %114 : vector<8x256xf32>
    %119 = arith.mulf %118, %114 : vector<8x256xf32>
    %120 = arith.mulf %119, %114 : vector<8x256xf32>
    %121 = arith.addf %114, %120 : vector<8x256xf32>
    %cst_42 = arith.constant 0.797884583 : f32
    %122 = vector.broadcast %cst_42 : f32 to vector<8x256xf32>
    %123 = arith.mulf %122, %121 : vector<8x256xf32>
    %124 = math.tanh %123 : vector<8x256xf32>
    %cst_43 = arith.constant 1.000000e+00 : f32
    %125 = vector.broadcast %cst_43 : f32 to vector<8x256xf32>
    %126 = arith.addf %125, %124 : vector<8x256xf32>
    %127 = arith.mulf %116, %126 : vector<8x256xf32>
    %128 = arith.truncf %127 : vector<8x256xf32> to vector<8x256xbf16>
    %c0_44 = arith.constant 0 : index
    %c0_45 = arith.constant 0 : index
    %129 = vector.load %arg12[%c0_44, %c0_45] : memref<256x128xbf16, #tpu.memory_space<vmem>>, vector<256x128xbf16>
    %cst_46 = arith.constant dense<0.000000e+00> : vector<8x128xf32>
    %130 = tpu.matmul %128, %129, %cst_46 {dimension_numbers = #tpu.dot_dimension_numbers<[1], [0], [0], [1], [0, 0, 1, 1], [], []>} : vector<8x256xbf16>, vector<256x128xbf16>, vector<8x128xf32> -> vector<8x128xf32>
    %c0_47 = arith.constant 0 : index
    %c0_48 = arith.constant 0 : index
    %131 = vector.load %arg13[%c0_47, %c0_48] : memref<1x128xf32, #tpu.memory_space<vmem>>, vector<1x128xf32>
    %132 = vector.broadcast %131 : vector<1x128xf32> to vector<8x128xf32>
    %133 = arith.addf %130, %132 : vector<8x128xf32>
    %134 = arith.addf %133, %84 : vector<8x128xf32>
    %135 = vector.shape_cast %134 : vector<8x128xf32> to vector<1x8x128xf32>
    %c0_49 = arith.constant 0 : index
    %c0_50 = arith.constant 0 : index
    %c0_51 = arith.constant 0 : index
    %136 = vector.load %arg14[%c0_49, %c0_50, %c0_51] : memref<1x8x128xf32, #tpu.memory_space<vmem>>, vector<1x8x128xf32>
    tpu.vector_store %arg14[%c0_49, %c0_50, %c0_51], %135 {strides = array<i32>} : memref<1x8x128xf32, #tpu.memory_space<vmem>>, vector<1x8x128xf32>,
    return
  }
  func.func @transform_0(%arg0: i32) -> (i32, i32, i32) {
    %c0_i32 = arith.constant 0 : i32
    %c0_i32_0 = arith.constant 0 : i32
    %c0_i32_1 = arith.constant 0 : i32
    return %arg0, %c0_i32, %c0_i32_0 : i32, i32, i32
  }
  func.func @transform_1(%arg0: i32) -> (i32, i32) {
    %c0_i32 = arith.constant 0 : i32
    %c0_i32_0 = arith.constant 0 : i32
    %c0_i32_1 = arith.constant 0 : i32
    return %c0_i32, %c0_i32_0 : i32, i32
  }
  func.func @transform_2(%arg0: i32) -> (i32, i32) {
    %c0_i32 = arith.constant 0 : i32
    %c0_i32_0 = arith.constant 0 : i32
    %c0_i32_1 = arith.constant 0 : i32
    return %c0_i32, %c0_i32_0 : i32, i32
  }
  func.func @transform_3(%arg0: i32) -> (i32, i32) {
    %c0_i32 = arith.constant 0 : i32
    %c0_i32_0 = arith.constant 0 : i32
    %c0_i32_1 = arith.constant 0 : i32
    return %c0_i32, %c0_i32_0 : i32, i32
  }
  func.func @transform_4(%arg0: i32) -> (i32, i32) {
    %c0_i32 = arith.constant 0 : i32
    %c0_i32_0 = arith.constant 0 : i32
    %c0_i32_1 = arith.constant 0 : i32
    return %c0_i32, %c0_i32_0 : i32, i32
  }
  func.func @transform_5(%arg0: i32) -> (i32, i32) {
    %c0_i32 = arith.constant 0 : i32
    %c0_i32_0 = arith.constant 0 : i32
    %c0_i32_1 = arith.constant 0 : i32
    return %c0_i32, %c0_i32_0 : i32, i32
  }
  func.func @transform_6(%arg0: i32) -> (i32, i32) {
    %c0_i32 = arith.constant 0 : i32
    %c0_i32_0 = arith.constant 0 : i32
    %c0_i32_1 = arith.constant 0 : i32
    return %c0_i32, %c0_i32_0 : i32, i32
  }
  func.func @transform_7(%arg0: i32) -> (i32, i32) {
    %c0_i32 = arith.constant 0 : i32
    %c0_i32_0 = arith.constant 0 : i32
    %c0_i32_1 = arith.constant 0 : i32
    return %c0_i32, %c0_i32_0 : i32, i32
  }
  func.func @transform_8(%arg0: i32) -> (i32, i32) {
    %c0_i32 = arith.constant 0 : i32
    %c0_i32_0 = arith.constant 0 : i32
    %c0_i32_1 = arith.constant 0 : i32
    return %c0_i32, %c0_i32_0 : i32, i32
  }
  func.func @transform_9(%arg0: i32) -> (i32, i32) {
    %c0_i32 = arith.constant 0 : i32
    %c0_i32_0 = arith.constant 0 : i32
    %c0_i32_1 = arith.constant 0 : i32
    return %c0_i32, %c0_i32_0 : i32, i32
  }
  func.func @transform_10(%arg0: i32) -> (i32, i32) {
    %c0_i32 = arith.constant 0 : i32
    %c0_i32_0 = arith.constant 0 : i32
    %c0_i32_1 = arith.constant 0 : i32
    return %c0_i32, %c0_i32_0 : i32, i32
  }
  func.func @transform_11(%arg0: i32) -> (i32, i32) {
    %c0_i32 = arith.constant 0 : i32
    %c0_i32_0 = arith.constant 0 : i32
    %c0_i32_1 = arith.constant 0 : i32
    return %c0_i32, %c0_i32_0 : i32, i32
  }
  func.func @transform_12(%arg0: i32) -> (i32, i32) {
    %c0_i32 = arith.constant 0 : i32
    %c0_i32_0 = arith.constant 0 : i32
    %c0_i32_1 = arith.constant 0 : i32
    return %c0_i32, %c0_i32_0 : i32, i32
  }
  func.func @transform_13(%arg0: i32) -> (i32, i32, i32) {
    %c0_i32 = arith.constant 0 : i32
    %c0_i32_0 = arith.constant 0 : i32
    %c0_i32_1 = arith.constant 0 : i32
    return %arg0, %c0_i32, %c0_i32_0 : i32, i32, i32
  }
}

</mosaic_0001>

<llo_original>
// kernel: _encoder_forward.1
$region0: #{_encoder_forward.1}
  #allocation0 [shape = 'u32[]', space=smem, size = 0x4, offset = 0x4, fixed_abs, tag = 'smem constant byte address 0x4 - core index']
  #allocation1 [shape = 'u32[144,128]{1,0:T(1,128)}', space=vmem, size = 0x12000, scoped, tag = 'internal scratch']
  %s0 = inlined_call_operand.vmem [shape: f32[2,8,128], index: 0, kind: input, shape index: {}]
  %s1 = inlined_call_operand.vmem [shape: f32[1,128], index: 1, kind: input, shape index: {}]
  %s2 = inlined_call_operand.vmem [shape: f32[1,128], index: 2, kind: input, shape index: {}]
  %s3 = inlined_call_operand.hbm [shape: bf16[128,384], index: 3, kind: input, shape index: {}]
  %s4 = inlined_call_operand.vmem [shape: f32[1,384], index: 4, kind: input, shape index: {}]
  %s5 = inlined_call_operand.hbm [shape: bf16[128,128], index: 5, kind: input, shape index: {}]
  %s6 = inlined_call_operand.vmem [shape: f32[1,128], index: 6, kind: input, shape index: {}]
  %s7 = inlined_call_operand.vmem [shape: f32[1,128], index: 7, kind: input, shape index: {}]
  %s8 = inlined_call_operand.vmem [shape: f32[1,128], index: 8, kind: input, shape index: {}]
  %s9 = inlined_call_operand.hbm [shape: bf16[128,256], index: 9, kind: input, shape index: {}]
  %s10 = inlined_call_operand.vmem [shape: f32[1,256], index: 10, kind: input, shape index: {}]
  %s11 = inlined_call_operand.hbm [shape: bf16[256,128], index: 11, kind: input, shape index: {}]
  %s12 = inlined_call_operand.vmem [shape: f32[1,128], index: 12, kind: input, shape index: {}]
  %s13 = inlined_call_operand.hbm [shape: f32[2,8,128], index: 13, kind: output, shape index: {}]
  %s14 = sld [smem:[#allocation0]]
  $region101: #{_encoder_forward.1} parent=0
    _
  %s16 = ssub.s32 1, %s14
  %s17 = scalar_select 0, %s16, %s14
  $region1: #{_encoder_forward.1} parent=0
    #allocation2 [shape = 'u8[98304]{0}', space=vmem, size = 0x18000, scoped, tag = 'input window, operand 3, single buffered']
    #allocation3 [shape = 's32[2]{0}', space=sflag, size = 0x8, scoped, tag = 'scoped memory for _encoder_forward.1']
    #allocation4 [shape = 's32[2]{0}', space=sflag, size = 0x8, scoped, tag = 'scoped memory for _encoder_forward.1']
    #allocation5 [shape = 'u8[32768]{0}', space=vmem, size = 0x8000, scoped, tag = 'input window, operand 5, single buffered']
    #allocation6 [shape = 's32[1]{0}', space=sflag, size = 0x4, scoped, tag = 'scoped memory for _encoder_forward.1']
    #allocation7 [shape = 'u8[65536]{0}', space=vmem, size = 0x10000, scoped, tag = 'input window, operand 9, single buffered']
    #allocation8 [shape = 'u8[65536]{0}', space=vmem, size = 0x10000, scoped, tag = 'input window, operand 11, single buffered']
    #allocation9 [shape = 's32[1]{0}', space=sflag, size = 0x4, scoped, tag = 'scoped memory for _encoder_forward.1']
    #allocation10 [shape = 'u8[8192]{0}', space=vmem, size = 0x2000, scoped, tag = 'output window, operand 0']
    %18 = vsyncpa [#allocation3], 0
    %19 = vsyncpa [#allocation6], 0
    %20 = vsyncpa [#allocation9], 0
    %21 = vsyncpa [#allocation4], 0
    %s22 = scalar_lea.sflag [#allocation4], 1
    %23 = vsyncpa %s22, 0
    loop: start=0, step=1, limit=4
    $region2: #{_encoder_forward.1} parent=1 // loop_pre_header
      _
    $region3: #{_encoder_forward.1} parent=1 // loop_header
      %s25 = sphi 0, %s29
      %p26 = scmp.ge.s32.totalorder %s25, 4
      %s35 = sphi 0, %s37
      %s38 = sphi 0, %s35
      %s39 = sphi 0, %s38
      %s55 = sphi 0, %s39
      %s59 = sphi 0, %s59
      %s61 = sphi 0, %s59
      %s62 = sphi 0, %s61
      %s76 = sphi 0, %s62
      %s80 = sphi 0, %s80
      %s82 = sphi 0, %s80
      %s83 = sphi 0, %s82
      %s97 = sphi 0, %s83
      %s101 = sphi 0, %s101
      %s103 = sphi 0, %s101
      %s104 = sphi 0, %s103
      %s118 = sphi 0, %s104
      %s122 = sphi 0, %s122
      %s124 = sphi 0, %s122
      %s125 = sphi 0, %s124
      %s139 = sphi 0, %s125
      %s143 = sphi 0, %s143
      %s145 = sphi 0, %s143
      %s146 = sphi 0, %s145
      %s160 = sphi 0, %s146
      %s164 = sphi 0, %s164
      %s166 = sphi 0, %s164
      %s167 = sphi 0, %s166
      %s181 = sphi 0, %s167
      %s185 = sphi 0, %s185
      %s187 = sphi 0, %s185
      %s188 = sphi 0, %s187
      %s202 = sphi 0, %s188
      %s206 = sphi 0, %s206
      %s208 = sphi 0, %s206
      %s209 = sphi 0, %s208
      %s223 = sphi 0, %s209
      %s227 = sphi 0, %s227
      %s229 = sphi 0, %s227
      %s230 = sphi 0, %s229
      %s244 = sphi 0, %s230
      %s248 = sphi 0, %s248
      %s250 = sphi 0, %s248
      %s251 = sphi 0, %s250
      %s265 = sphi 0, %s251
      %s269 = sphi 0, %s269
      %s271 = sphi 0, %s269
      %s272 = sphi 0, %s271
      %s286 = sphi 0, %s272
      %s290 = sphi 0, %s290
      %s292 = sphi 0, %s290
      %s293 = sphi 0, %s292
      %s307 = sphi 0, %s293
      %s313 = sphi 0, %s315
      %s316 = sphi 0, %s313
      %s317 = sphi 0, %s316
      %s333 = sphi 0, %s317
    $region4: #{_encoder_forward.1} parent=1 // loop_header_branch
      %28 = sbr.rel (%p26) target = $region8
    $region5: #{_encoder_forward.1} parent=1 // loop_body
      %s30 = ssub.s32 %s25, 1
      %s31 = ssub.s32 %s25, 2
      %s32 = sadd.s32 %s25, 1
      %s33 = ssub.s32 %s25, %s32
      %p34 = scmp.eq.s32.totalorder %s33, 0
      %s36 = sadd.s32 %s35, 1
      %s37 = scalar_select %p34, %s35, %s36
      %p40 = pneg %p34
      %p41 = scmp.eq.s32.totalorder %s25, 1
      %p42 = por %p40, %p41
      %p43 = scmp.ne.s32.totalorder %s35, %s38
      %p44 = scmp.eq.s32.totalorder %s25, 0
      %p45 = por %p43, %p44
      %p46 = scmp.ne.s32.totalorder %s35, %s38
      %p47 = scmp.eq.s32.totalorder %s30, 1
      %p48 = por %p46, %p47
      %p49 = scmp.ne.s32.totalorder %s38, %s39
      %p50 = scmp.eq.s32.totalorder %s30, 0
      %p51 = por %p49, %p50
      %p52 = scmp.ne.s32.totalorder %s38, %s39
      %p53 = scmp.eq.s32.totalorder %s31, 1
      %p54 = por %p52, %p53
      %p56 = scmp.ne.s32.totalorder %s39, %s55
      %p57 = scmp.eq.s32.totalorder %s31, 0
      %p58 = por %p56, %p57
      %s60 = sadd.s32 %s59, 1
      %p63 = scmp.eq.s32.totalorder %s25, 1
      %p64 = scmp.ne.s32.totalorder %s59, %s61
      %p65 = scmp.eq.s32.totalorder %s25, 0
      %p66 = por %p64, %p65
      %p67 = scmp.ne.s32.totalorder %s59, %s61
      %p68 = scmp.eq.s32.totalorder %s30, 1
      %p69 = por %p67, %p68
      %p70 = scmp.ne.s32.totalorder %s61, %s62
      %p71 = scmp.eq.s32.totalorder %s30, 0
      %p72 = por %p70, %p71
      %p73 = scmp.ne.s32.totalorder %s61, %s62
      %p74 = scmp.eq.s32.totalorder %s31, 1
      %p75 = por %p73, %p74
      %p77 = scmp.ne.s32.totalorder %s62, %s76
      %p78 = scmp.eq.s32.totalorder %s31, 0
      %p79 = por %p77, %p78
      %s81 = sadd.s32 %s80, 1
      %p84 = scmp.eq.s32.totalorder %s25, 1
      %p85 = scmp.ne.s32.totalorder %s80, %s82
      %p86 = scmp.eq.s32.totalorder %s25, 0
      %p87 = por %p85, %p86
      %p88 = scmp.ne.s32.totalorder %s80, %s82
      %p89 = scmp.eq.s32.totalorder %s30, 1
      %p90 = por %p88, %p89
      %p91 = scmp.ne.s32.totalorder %s82, %s83
      %p92 = scmp.eq.s32.totalorder %s30, 0
      %p93 = por %p91, %p92
      %p94 = scmp.ne.s32.totalorder %s82, %s83
      %p95 = scmp.eq.s32.totalorder %s31, 1
      %p96 = por %p94, %p95
      %p98 = scmp.ne.s32.totalorder %s83, %s97
      %p99 = scmp.eq.s32.totalorder %s31, 0
      %p100 = por %p98, %p99
      %s102 = sadd.s32 %s101, 1
      %p105 = scmp.eq.s32.totalorder %s25, 1
      %p106 = scmp.ne.s32.totalorder %s101, %s103
      %p107 = scmp.eq.s32.totalorder %s25, 0
      %p108 = por %p106, %p107
      %p109 = scmp.ne.s32.totalorder %s101, %s103
      %p110 = scmp.eq.s32.totalorder %s30, 1
      %p111 = por %p109, %p110
      %p112 = scmp.ne.s32.totalorder %s103, %s104
      %p113 = scmp.eq.s32.totalorder %s30, 0
      %p114 = por %p112, %p113
      %p115 = scmp.ne.s32.totalorder %s103, %s104
      %p116 = scmp.eq.s32.totalorder %s31, 1
      %p117 = por %p115, %p116
      %p119 = scmp.ne.s32.totalorder %s104, %s118
      %p120 = scmp.eq.s32.totalorder %s31, 0
      %p121 = por %p119, %p120
      %s123 = sadd.s32 %s122, 1
      %p126 = scmp.eq.s32.totalorder %s25, 1
      %p127 = scmp.ne.s32.totalorder %s122, %s124
      %p128 = scmp.eq.s32.totalorder %s25, 0
      %p129 = por %p127, %p128
      %p130 = scmp.ne.s32.totalorder %s122, %s124
      %p131 = scmp.eq.s32.totalorder %s30, 1
      %p132 = por %p130, %p131
      %p133 = scmp.ne.s32.totalorder %s124, %s125
      %p134 = scmp.eq.s32.totalorder %s30, 0
      %p135 = por %p133, %p134
      %p136 = scmp.ne.s32.totalorder %s124, %s125
      %p137 = scmp.eq.s32.totalorder %s31, 1
      %p138 = por %p136, %p137
      %p140 = scmp.ne.s32.totalorder %s125, %s139
      %p141 = scmp.eq.s32.totalorder %s31, 0
      %p142 = por %p140, %p141
      %s144 = sadd.s32 %s143, 1
      %p147 = scmp.eq.s32.totalorder %s25, 1
      %p148 = scmp.ne.s32.totalorder %s143, %s145
      %p149 = scmp.eq.s32.totalorder %s25, 0
      %p150 = por %p148, %p149
      %p151 = scmp.ne.s32.totalorder %s143, %s145
      %p152 = scmp.eq.s32.totalorder %s30, 1
      %p153 = por %p151, %p152
      %p154 = scmp.ne.s32.totalorder %s145, %s146
      %p155 = scmp.eq.s32.totalorder %s30, 0
      %p156 = por %p154, %p155
      %p157 = scmp.ne.s32.totalorder %s145, %s146
      %p158 = scmp.eq.s32.totalorder %s31, 1
      %p159 = por %p157, %p158
      %p161 = scmp.ne.s32.totalorder %s146, %s160
      %p162 = scmp.eq.s32.totalorder %s31, 0
      %p163 = por %p161, %p162
      %s165 = sadd.s32 %s164, 1
      %p168 = scmp.eq.s32.totalorder %s25, 1
      %p169 = scmp.ne.s32.totalorder %s164, %s166
      %p170 = scmp.eq.s32.totalorder %s25, 0
      %p171 = por %p169, %p170
      %p172 = scmp.ne.s32.totalorder %s164, %s166
      %p173 = scmp.eq.s32.totalorder %s30, 1
      %p174 = por %p172, %p173
      %p175 = scmp.ne.s32.totalorder %s166, %s167
      %p176 = scmp.eq.s32.totalorder %s30, 0
      %p177 = por %p175, %p176
      %p178 = scmp.ne.s32.totalorder %s166, %s167
      %p179 = scmp.eq.s32.totalorder %s31, 1
      %p180 = por %p178, %p179
      %p182 = scmp.ne.s32.totalorder %s167, %s181
      %p183 = scmp.eq.s32.totalorder %s31, 0
      %p184 = por %p182, %p183
      %s186 = sadd.s32 %s185, 1
      %p189 = scmp.eq.s32.totalorder %s25, 1
      %p190 = scmp.ne.s32.totalorder %s185, %s187
      %p191 = scmp.eq.s32.totalorder %s25, 0
      %p192 = por %p190, %p191
      %p193 = scmp.ne.s32.totalorder %s185, %s187
      %p194 = scmp.eq.s32.totalorder %s30, 1
      %p195 = por %p193, %p194
      %p196 = scmp.ne.s32.totalorder %s187, %s188
      %p197 = scmp.eq.s32.totalorder %s30, 0
      %p198 = por %p196, %p197
      %p199 = scmp.ne.s32.totalorder %s187, %s188
      %p200 = scmp.eq.s32.totalorder %s31, 1
      %p201 = por %p199, %p200
      %p203 = scmp.ne.s32.totalorder %s188, %s202
      %p204 = scmp.eq.s32.totalorder %s31, 0
      %p205 = por %p203, %p204
      %s207 = sadd.s32 %s206, 1
      %p210 = scmp.eq.s32.totalorder %s25, 1
      %p211 = scmp.ne.s32.totalorder %s206, %s208
      %p212 = scmp.eq.s32.totalorder %s25, 0
      %p213 = por %p211, %p212
      %p214 = scmp.ne.s32.totalorder %s206, %s208
      %p215 = scmp.eq.s32.totalorder %s30, 1
      %p216 = por %p214, %p215
      %p217 = scmp.ne.s32.totalorder %s208, %s209
      %p218 = scmp.eq.s32.totalorder %s30, 0
      %p219 = por %p217, %p218
      %p220 = scmp.ne.s32.totalorder %s208, %s209
      %p221 = scmp.eq.s32.totalorder %s31, 1
      %p222 = por %p220, %p221
      %p224 = scmp.ne.s32.totalorder %s209, %s223
      %p225 = scmp.eq.s32.totalorder %s31, 0
      %p226 = por %p224, %p225
      %s228 = sadd.s32 %s227, 1
      %p231 = scmp.eq.s32.totalorder %s25, 1
      %p232 = scmp.ne.s32.totalorder %s227, %s229
      %p233 = scmp.eq.s32.totalorder %s25, 0
      %p234 = por %p232, %p233
      %p235 = scmp.ne.s32.totalorder %s227, %s229
      %p236 = scmp.eq.s32.totalorder %s30, 1
      %p237 = por %p235, %p236
      %p238 = scmp.ne.s32.totalorder %s229, %s230
      %p239 = scmp.eq.s32.totalorder %s30, 0
      %p240 = por %p238, %p239
      %p241 = scmp.ne.s32.totalorder %s229, %s230
      %p242 = scmp.eq.s32.totalorder %s31, 1
      %p243 = por %p241, %p242
      %p245 = scmp.ne.s32.totalorder %s230, %s244
      %p246 = scmp.eq.s32.totalorder %s31, 0
      %p247 = por %p245, %p246
      %s249 = sadd.s32 %s248, 1
      %p252 = scmp.eq.s32.totalorder %s25, 1
      %p253 = scmp.ne.s32.totalorder %s248, %s250
      %p254 = scmp.eq.s32.totalorder %s25, 0
      %p255 = por %p253, %p254
      %p256 = scmp.ne.s32.totalorder %s248, %s250
      %p257 = scmp.eq.s32.totalorder %s30, 1
      %p258 = por %p256, %p257
      %p259 = scmp.ne.s32.totalorder %s250, %s251
      %p260 = scmp.eq.s32.totalorder %s30, 0
      %p261 = por %p259, %p260
      %p262 = scmp.ne.s32.totalorder %s250, %s251
      %p263 = scmp.eq.s32.totalorder %s31, 1
      %p264 = por %p262, %p263
      %p266 = scmp.ne.s32.totalorder %s251, %s265
      %p267 = scmp.eq.s32.totalorder %s31, 0
      %p268 = por %p266, %p267
      %s270 = sadd.s32 %s269, 1
      %p273 = scmp.eq.s32.totalorder %s25, 1
      %p274 = scmp.ne.s32.totalorder %s269, %s271
      %p275 = scmp.eq.s32.totalorder %s25, 0
      %p276 = por %p274, %p275
      %p277 = scmp.ne.s32.totalorder %s269, %s271
      %p278 = scmp.eq.s32.totalorder %s30, 1
      %p279 = por %p277, %p278
      %p280 = scmp.ne.s32.totalorder %s271, %s272
      %p281 = scmp.eq.s32.totalorder %s30, 0
      %p282 = por %p280, %p281
      %p283 = scmp.ne.s32.totalorder %s271, %s272
      %p284 = scmp.eq.s32.totalorder %s31, 1
      %p285 = por %p283, %p284
      %p287 = scmp.ne.s32.totalorder %s272, %s286
      %p288 = scmp.eq.s32.totalorder %s31, 0
      %p289 = por %p287, %p288
      %s291 = sadd.s32 %s290, 1
      %p294 = scmp.eq.s32.totalorder %s25, 1
      %p295 = scmp.ne.s32.totalorder %s290, %s292
      %p296 = scmp.eq.s32.totalorder %s25, 0
      %p297 = por %p295, %p296
      %p298 = scmp.ne.s32.totalorder %s290, %s292
      %p299 = scmp.eq.s32.totalorder %s30, 1
      %p300 = por %p298, %p299
      %p301 = scmp.ne.s32.totalorder %s292, %s293
      %p302 = scmp.eq.s32.totalorder %s30, 0
      %p303 = por %p301, %p302
      %p304 = scmp.ne.s32.totalorder %s292, %s293
      %p305 = scmp.eq.s32.totalorder %s31, 1
      %p306 = por %p304, %p305
      %p308 = scmp.ne.s32.totalorder %s293, %s307
      %p309 = scmp.eq.s32.totalorder %s31, 0
      %p310 = por %p308, %p309
      %s311 = ssub.s32 %s25, %s32
      %p312 = scmp.eq.s32.totalorder %s311, 0
      %s314 = sadd.s32 %s313, 1
      %s315 = scalar_select %p312, %s313, %s314
      %p318 = pneg %p312
      %p319 = scmp.eq.s32.totalorder %s25, 1
      %p320 = por %p318, %p319
      %p321 = scmp.ne.s32.totalorder %s313, %s316
      %p322 = scmp.eq.s32.totalorder %s25, 0
      %p323 = por %p321, %p322
      %p324 = scmp.ne.s32.totalorder %s313, %s316
      %p325 = scmp.eq.s32.totalorder %s30, 1
      %p326 = por %p324, %p325
      %p327 = scmp.ne.s32.totalorder %s316, %s317
      %p328 = scmp.eq.s32.totalorder %s30, 0
      %p329 = por %p327, %p328
      %p330 = scmp.ne.s32.totalorder %s316, %s317
      %p331 = scmp.eq.s32.totalorder %s31, 1
      %p332 = por %p330, %p331
      %p334 = scmp.ne.s32.totalorder %s317, %s333
      %p335 = scmp.eq.s32.totalorder %s31, 0
      %p336 = por %p334, %p335
      %p337 = scmp.le.s32.totalorder 1, %s25
      %p338 = scmp.lt.s32.totalorder %s25, 3
      %p339 = pnand %p337, %p338
      %p340 = pneg %p339
      // Predicated region
      $region9: #{_encoder_forward.1} parent=5 // pred_check
        _
      $region10: #{_encoder_forward.1} parent=5 // pred_check_branch
        %342 = sbr.rel (%p339) target = $region12
      $region11: #{_encoder_forward.1} parent=5 // pred_region
        %s343 = ssub.s32 %s25, 1
        // Predicated region
        $region13: #{_encoder_forward.1} parent=11 // pred_check
          %p344 = pneg %p72
        $region14: #{_encoder_forward.1} parent=11 // pred_check_branch
          %346 = sbr.rel (%p344) target = $region16
        $region15: #{_encoder_forward.1} parent=11 // pred_region
          _
        $region16: #{_encoder_forward.1} parent=11 // pred_fallthru
          _
        // Predicated region
        $region17: #{_encoder_forward.1} parent=11 // pred_check
          %p347 = pneg %p93
        $region18: #{_encoder_forward.1} parent=11 // pred_check_branch
          %349 = sbr.rel (%p347) target = $region20
        $region19: #{_encoder_forward.1} parent=11 // pred_region
          _
        $region20: #{_encoder_forward.1} parent=11 // pred_fallthru
          _
        // Predicated region
        $region21: #{_encoder_forward.1} parent=11 // pred_check
          %p350 = pneg %p114
        $region22: #{_encoder_forward.1} parent=11 // pred_check_branch
          %352 = sbr.rel (%p350) target = $region24
        $region23: #{_encoder_forward.1} parent=11 // pred_region
          %s354 = ssub.s32 3072, 3072
          %355 = vsyncadd [#allocation3], %s354
          %s356 = sshll.u32 [#allocation2], 4
          %s357 = int_to_ptr.vmem [resolvable:$true] %s356
          %362 = dma.hbm_to_vmem [thread:$0]  %s3, 3072, %s357, [#allocation3], 192, 192, 12
        $region24: #{_encoder_forward.1} parent=11 // pred_fallthru
          _
        // Predicated region
        $region25: #{_encoder_forward.1} parent=11 // pred_check
          %p363 = pneg %p135
        $region26: #{_encoder_forward.1} parent=11 // pred_check_branch
          %365 = sbr.rel (%p363) target = $region28
        $region27: #{_encoder_forward.1} parent=11 // pred_region
          _
        $region28: #{_encoder_forward.1} parent=11 // pred_fallthru
          _
        // Predicated region
        $region29: #{_encoder_forward.1} parent=11 // pred_check
          %p366 = pneg %p156
        $region30: #{_encoder_forward.1} parent=11 // pred_check_branch
          %368 = sbr.rel (%p366) target = $region32
        $region31: #{_encoder_forward.1} parent=11 // pred_region
          %s370 = ssub.s32 1024, 1024
          %371 = vsyncadd [#allocation6], %s370
          %s372 = sshll.u32 [#allocation5], 4
          %s373 = int_to_ptr.vmem [resolvable:$true] %s372
          %378 = dma.hbm_to_vmem [thread:$0]  %s5, 1024, %s373, [#allocation6], 64, 64, 4
        $region32: #{_encoder_forward.1} parent=11 // pred_fallthru
          _
        // Predicated region
        $region33: #{_encoder_forward.1} parent=11 // pred_check
          %p379 = pneg %p177
        $region34: #{_encoder_forward.1} parent=11 // pred_check_branch
          %381 = sbr.rel (%p379) target = $region36
        $region35: #{_encoder_forward.1} parent=11 // pred_region
          _
        $region36: #{_encoder_forward.1} parent=11 // pred_fallthru
          _
        // Predicated region
        $region37: #{_encoder_forward.1} parent=11 // pred_check
          %p382 = pneg %p198
        $region38: #{_encoder_forward.1} parent=11 // pred_check_branch
          %384 = sbr.rel (%p382) target = $region40
        $region39: #{_encoder_forward.1} parent=11 // pred_region
          _
        $region40: #{_encoder_forward.1} parent=11 // pred_fallthru
          _
        // Predicated region
        $region41: #{_encoder_forward.1} parent=11 // pred_check
          %p385 = pneg %p219
        $region42: #{_encoder_forward.1} parent=11 // pred_check_branch
          %387 = sbr.rel (%p385) target = $region44
        $region43: #{_encoder_forward.1} parent=11 // pred_region
          _
        $region44: #{_encoder_forward.1} parent=11 // pred_fallthru
          _
        // Predicated region
        $region45: #{_encoder_forward.1} parent=11 // pred_check
          %p388 = pneg %p240
        $region46: #{_encoder_forward.1} parent=11 // pred_check_branch
          %390 = sbr.rel (%p388) target = $region48
        $region47: #{_encoder_forward.1} parent=11 // pred_region
          %s392 = ssub.s32 2048, 2048
          %393 = vsyncadd [#allocation6], %s392
          %s394 = sshll.u32 [#allocation7], 4
          %s395 = int_to_ptr.vmem [resolvable:$true] %s394
          %400 = dma.hbm_to_vmem [thread:$0]  %s9, 2048, %s395, [#allocation6], 128, 128, 8
        $region48: #{_encoder_forward.1} parent=11 // pred_fallthru
          _
        // Predicated region
        $region49: #{_encoder_forward.1} parent=11 // pred_check
          %p401 = pneg %p261
        $region50: #{_encoder_forward.1} parent=11 // pred_check_branch
          %403 = sbr.rel (%p401) target = $region52
        $region51: #{_encoder_forward.1} parent=11 // pred_region
          _
        $region52: #{_encoder_forward.1} parent=11 // pred_fallthru
          _
        // Predicated region
        $region53: #{_encoder_forward.1} parent=11 // pred_check
          %p404 = pneg %p282
        $region54: #{_encoder_forward.1} parent=11 // pred_check_branch
          %406 = sbr.rel (%p404) target = $region56
        $region55: #{_encoder_forward.1} parent=11 // pred_region
          %s408 = ssub.s32 2048, 2048
          %409 = vsyncadd [#allocation9], %s408
          %s410 = sshll.u32 [#allocation8], 4
          %s411 = int_to_ptr.vmem [resolvable:$true] %s410
          %416 = dma.hbm_to_vmem [thread:$0]  %s11, 2048, %s411, [#allocation9], 64, 64, 4
        $region56: #{_encoder_forward.1} parent=11 // pred_fallthru
          _
        // Predicated region
        $region57: #{_encoder_forward.1} parent=11 // pred_check
          %p417 = pneg %p303
        $region58: #{_encoder_forward.1} parent=11 // pred_check_branch
          %419 = sbr.rel (%p417) target = $region60
        $region59: #{_encoder_forward.1} parent=11 // pred_region
          _
        $region60: #{_encoder_forward.1} parent=11 // pred_fallthru
          _
      $region12: #{_encoder_forward.1} parent=5 // pred_fallthru
        _
      %p420 = scmp.lt.s32.totalorder %s25, 2
      // Predicated region
      $region61: #{_encoder_forward.1} parent=5 // pred_check
        %p421 = pneg %p420
      $region62: #{_encoder_forward.1} parent=5 // pred_check_branch
        %423 = sbr.rel (%p421) target = $region64
      $region63: #{_encoder_forward.1} parent=5 // pred_region
        // Predicated region
        $region65: #{_encoder_forward.1} parent=63 // pred_check
          %p424 = pneg %p45
        $region66: #{_encoder_forward.1} parent=63 // pred_check_branch
          %426 = sbr.rel (%p424) target = $region68
        $region67: #{_encoder_forward.1} parent=63 // pred_region
          %p427 = scmp.lt.s32.totalorder %s25, 1
          %s428 = scalar_select %p427, %s25, 1
          %s429 = smul.addr %s428, 8
          %s430 = scalar_lea.vmem %s0, %s429
        $region68: #{_encoder_forward.1} parent=63 // pred_fallthru
          _
      $region64: #{_encoder_forward.1} parent=5 // pred_fallthru
        _
      %p431 = scmp.le.s32.totalorder 1, %s25
      %p432 = scmp.lt.s32.totalorder %s25, 3
      %p433 = pnand %p431, %p432
      %p434 = pneg %p433
      // Predicated region
      $region69: #{_encoder_forward.1} parent=5 // pred_check
        _
      $region70: #{_encoder_forward.1} parent=5 // pred_check_branch
        %436 = sbr.rel (%p433) target = $region72
      $region71: #{_encoder_forward.1} parent=5 // pred_region
        %s437 = ssub.s32 %s25, 1
        // Predicated region
        $region73: #{_encoder_forward.1} parent=71 // pred_check
          %p438 = pneg %p114
        $region74: #{_encoder_forward.1} parent=71 // pred_check_branch
          %440 = sbr.rel (%p438) target = $region76
        $region75: #{_encoder_forward.1} parent=71 // pred_region
          %441 = dma.done [#allocation3], 3072
        $region76: #{_encoder_forward.1} parent=71 // pred_fallthru
          _
        // Predicated region
        $region77: #{_encoder_forward.1} parent=71 // pred_check
          %p442 = pneg %p156
        $region78: #{_encoder_forward.1} parent=71 // pred_check_branch
          %444 = sbr.rel (%p442) target = $region80
        $region79: #{_encoder_forward.1} parent=71 // pred_region
          %445 = dma.done [#allocation6], 1024
        $region80: #{_encoder_forward.1} parent=71 // pred_fallthru
          _
        // Predicated region
        $region81: #{_encoder_forward.1} parent=71 // pred_check
          %p446 = pneg %p240
        $region82: #{_encoder_forward.1} parent=71 // pred_check_branch
          %448 = sbr.rel (%p446) target = $region84
        $region83: #{_encoder_forward.1} parent=71 // pred_region
          %449 = dma.done [#allocation6], 2048
        $region84: #{_encoder_forward.1} parent=71 // pred_fallthru
          _
        // Predicated region
        $region85: #{_encoder_forward.1} parent=71 // pred_check
          %p450 = pneg %p282
        $region86: #{_encoder_forward.1} parent=71 // pred_check_branch
          %452 = sbr.rel (%p450) target = $region88
        $region87: #{_encoder_forward.1} parent=71 // pred_region
          %453 = dma.done [#allocation9], 2048
        $region88: #{_encoder_forward.1} parent=71 // pred_fallthru
          _
        %p454 = scmp.lt.s32.totalorder %s30, 1
        %s455 = scalar_select %p454, %s30, 1
        %s456 = smul.addr %s455, 8
        %s457 = scalar_lea.vmem %s0, %s456
        %p458 = pneg %p51
        %p459 = pneg %p48
        %p460 = pneg %p72
        %p461 = pneg %p69
        %p462 = pneg %p93
        %p463 = pneg %p90
        %p464 = pneg %p114
        %p465 = pneg %p111
        %p466 = pneg %p135
        %p467 = pneg %p132
        %p468 = pneg %p156
        %p469 = pneg %p153
        %p470 = pneg %p177
        %p471 = pneg %p174
        %p472 = pneg %p198
        %p473 = pneg %p195
        %p474 = pneg %p219
        %p475 = pneg %p216
        %p476 = pneg %p240
        %p477 = pneg %p237
        %p478 = pneg %p261
        %p479 = pneg %p258
        %p480 = pneg %p282
        %p481 = pneg %p279
        %p482 = pneg %p303
        %p483 = pneg %p300
        %p484 = pneg %p329
        %p485 = pneg %p326
        %s486 = sand.u32 %s316, 1
        %s487 = scalar_lea.sflag [#allocation4], %s486
        %s488 = sand.u32 %s316, 1
        %s489 = smul.addr %s488, 8
        %s490 = scalar_lea.vmem [#allocation10], %s489
        %p491 = scmp.lt.s32.totalorder %s30, 1
        %s492 = scalar_select %p491, %s30, 1
        %s493 = smul.addr %s492, 8
        %s494 = scalar_lea.vmem %s0, %s493
        %v496 = vlaneseq
        %v497 = vand.u32 %v496, 127
        %vm498 = vcmp.lt.s32.totalorder %v497, 49
        %v499 = vsel %vm498, 1, 0
        %v500 = vcvt.s32.f32 %v499
        %v501 = vld [vmem:[%s494] sm:$0xff]
        %v502 = vld [vmem:[%s1] sm:$0x1]
        %v503 = vld [vmem:[%s2] sm:$0x1]
        %504 = vadd.xlane.f32.xlu0 %v501
        %v505 = vpop.xlane.xlu0 %504
        %v506 = vmul.f32 %v505, 0.020408163
        %v507 = vsub.f32 %v501, %v506
        %v508 = vmul.f32 %v507, %v500
        %v509 = vmul.f32 %v508, %v508
        %510 = vadd.xlane.f32.xlu0 %v509
        %v511 = vpop.xlane.xlu0 %510
        %v512 = vmul.f32 %v511, 0.020408163
        %v513 = vadd.f32 %v512, 1e-05
        %v514 = vrsqrt.pop %v513
        %v515 = vmul.f32 %v508, %v514
        %v517 = vlaneseq
        %v518 = vshrl.u32 %v517, 7
        %v519 = vsub.s32 0, %v518
        %v520 = vrot.slane %v502, %v519
        %v522 = vmul.f32 %v515, %v520
        %v524 = vlaneseq
        %v525 = vshrl.u32 %v524, 7
        %v526 = vsub.s32 0, %v525
        %v527 = vrot.slane %v503, %v526
        %v529 = vadd.f32 %v522, %v527
        %v530 = vpack.c.bf16 %v529, %v529
        %v531 = vld [vmem:[#allocation2] sm:$0xff]
        %v532 = vld [vmem:[#allocation2 + $0x8] sm:$0xf]
        %v533 = vld [vmem:[#allocation2 + $0xc] sm:$0xff]
        %v534 = vld [vmem:[#allocation2 + $0x14] sm:$0xf]
        %v535 = vld [vmem:[#allocation2 + $0x18] sm:$0xff]
        %v536 = vld [vmem:[#allocation2 + $0x20] sm:$0xf]
        %v537 = vld [vmem:[#allocation2 + $0x24] sm:$0xff]
        %v538 = vld [vmem:[#allocation2 + $0x2c] sm:$0xf]
        %v539 = vld [vmem:[#allocation2 + $0x30] sm:$0xff]
        %v540 = vld [vmem:[#allocation2 + $0x38] sm:$0xf]
        %v541 = vld [vmem:[#allocation2 + $0x3c] sm:$0xff]
        %v542 = vld [vmem:[#allocation2 + $0x44] sm:$0xf]
        %v543 = vld [vmem:[#allocation2 + $0x48] sm:$0xff]
        %v544 = vld [vmem:[#allocation2 + $0x50] sm:$0xf]
        %v545 = vld [vmem:[#allocation2 + $0x54] sm:$0xff]
        %v546 = vld [vmem:[#allocation2 + $0x5c] sm:$0xf]
        %v547 = vld [vmem:[#allocation2 + $0x60] sm:$0xff]
        %v548 = vld [vmem:[#allocation2 + $0x68] sm:$0xf]
        %v549 = vld [vmem:[#allocation2 + $0x6c] sm:$0xff]
        %v550 = vld [vmem:[#allocation2 + $0x74] sm:$0xf]
        %v551 = vld [vmem:[#allocation2 + $0x78] sm:$0xff]
        %v552 = vld [vmem:[#allocation2 + $0x80] sm:$0xf]
        %v553 = vld [vmem:[#allocation2 + $0x84] sm:$0xff]
        %v554 = vld [vmem:[#allocation2 + $0x8c] sm:$0xf]
        %v555 = vld [vmem:[#allocation2 + $0x90] sm:$0xff]
        %v556 = vld [vmem:[#allocation2 + $0x98] sm:$0xf]
        %v557 = vld [vmem:[#allocation2 + $0x9c] sm:$0xff]
        %v558 = vld [vmem:[#allocation2 + $0xa4] sm:$0xf]
        %v559 = vld [vmem:[#allocation2 + $0xa8] sm:$0xff]
        %v560 = vld [vmem:[#allocation2 + $0xb0] sm:$0xf]
        %v561 = vld [vmem:[#allocation2 + $0xb4] sm:$0xff]
        %v562 = vld [vmem:[#allocation2 + $0xbc] sm:$0xf]
        %v563 = vld [vmem:[%s4] sm:$0x7]
        %v565 = vlaneseq
        %v566 = vshrl.u32 %v565, 7
        %v567 = vsub.s32 0, %v566
        %v568 = vrot.slane %v563, %v567
        %v569 = vlaneseq
        %v570 = vshrl.u32 %v569, 7
        %v571 = vsub.s32 1, %v570
        %v572 = vrot.slane %v563, %v571
        %v573 = vlaneseq
        %v574 = vshrl.u32 %v573, 7
        %v575 = vsub.s32 2, %v574
        %v576 = vrot.slane %v563, %v575
        %v612 = vunpack.c.l.b16 %v531
        %v613 = vunpack.c.h.b16 %v531
        %v614 = vunpack.c.l.b16 %v532
        %v615 = vunpack.c.l.b16 %v533
        %v616 = vunpack.c.h.b16 %v533
        %v617 = vunpack.c.l.b16 %v534
        %v618 = vunpack.c.l.b16 %v535
        %v619 = vunpack.c.h.b16 %v535
        %v620 = vunpack.c.l.b16 %v536
        %v621 = vunpack.c.l.b16 %v537
        %v622 = vunpack.c.h.b16 %v537
        %v623 = vunpack.c.l.b16 %v538
        %v624 = vunpack.c.l.b16 %v539
        %v625 = vunpack.c.h.b16 %v539
        %v626 = vunpack.c.l.b16 %v540
        %v627 = vunpack.c.l.b16 %v541
        %v628 = vunpack.c.h.b16 %v541
        %v629 = vunpack.c.l.b16 %v542
        %v630 = vunpack.c.l.b16 %v543
        %v631 = vunpack.c.h.b16 %v543
        %v632 = vunpack.c.l.b16 %v544
        %v633 = vunpack.c.l.b16 %v545
        %v634 = vunpack.c.h.b16 %v545
        %v635 = vunpack.c.l.b16 %v546
        %v636 = vunpack.c.l.b16 %v547
        %v637 = vunpack.c.h.b16 %v547
        %v638 = vunpack.c.l.b16 %v548
        %v639 = vunpack.c.l.b16 %v549
        %v640 = vunpack.c.h.b16 %v549
        %v641 = vunpack.c.l.b16 %v550
        %v642 = vunpack.c.l.b16 %v551
        %v643 = vunpack.c.h.b16 %v551
        %v644 = vunpack.c.l.b16 %v552
        %v645 = vunpack.c.l.b16 %v553
        %v646 = vunpack.c.h.b16 %v553
        %v647 = vunpack.c.l.b16 %v554
        %v648 = vunpack.c.l.b16 %v555
        %v649 = vunpack.c.h.b16 %v555
        %v650 = vunpack.c.l.b16 %v556
        %v651 = vunpack.c.l.b16 %v557
        %v652 = vunpack.c.h.b16 %v557
        %v653 = vunpack.c.l.b16 %v558
        %v654 = vunpack.c.l.b16 %v559
        %v655 = vunpack.c.h.b16 %v559
        %v656 = vunpack.c.l.b16 %v560
        %v657 = vunpack.c.l.b16 %v561
        %v658 = vunpack.c.h.b16 %v561
        %v659 = vunpack.c.l.b16 %v562
        %v660 = vpack.c.b16 %v615, %v612
        %v661 = vpack.c.b16 %v616, %v613
        %v662 = vpack.c.b16 %v617, %v614
        %v663 = vpack.c.b16 %v621, %v618
        %v664 = vpack.c.b16 %v622, %v619
        %v665 = vpack.c.b16 %v623, %v620
        %v666 = vpack.c.b16 %v627, %v624
        %v667 = vpack.c.b16 %v628, %v625
        %v668 = vpack.c.b16 %v629, %v626
        %v669 = vpack.c.b16 %v633, %v630
        %v670 = vpack.c.b16 %v634, %v631
        %v671 = vpack.c.b16 %v635, %v632
        %v672 = vpack.c.b16 %v639, %v636
        %v673 = vpack.c.b16 %v640, %v637
        %v674 = vpack.c.b16 %v641, %v638
        %v675 = vpack.c.b16 %v645, %v642
        %v676 = vpack.c.b16 %v646, %v643
        %v677 = vpack.c.b16 %v647, %v644
        %v678 = vpack.c.b16 %v651, %v648
        %v679 = vpack.c.b16 %v652, %v649
        %v680 = vpack.c.b16 %v653, %v650
        %v681 = vpack.c.b16 %v657, %v654
        %v682 = vpack.c.b16 %v658, %v655
        %v683 = vpack.c.b16 %v659, %v656
        %708 = vmatprep.subr.bf16.mxu0 %v661
        %709 = vmatpush1.bf16.msra.mxu0 %v660
        %710 = vmatprep.subr.bf16.mxu0 %v664
        %711 = vmatpush1.bf16.msra.mxu0 %v663
        %712 = vmatprep.subr.bf16.mxu0 %v667
        %713 = vmatpush1.bf16.msra.mxu0 %v666
        %714 = vmatprep.subr.bf16.mxu0 %v670
        %715 = vmatpush1.bf16.msra.mxu0 %v669
        %716 = vmatprep.subr.bf16.mxu0 %v673
        %717 = vmatpush1.bf16.msra.mxu0 %v672
        %718 = vmatprep.subr.bf16.mxu0 %v676
        %719 = vmatpush1.bf16.msra.mxu0 %v675
        %720 = vmatprep.subr.bf16.mxu0 %v679
        %721 = vmatpush1.bf16.msra.mxu0 %v678
        %722 = vmatprep.subr.bf16.mxu0 %v682
        %723 = vmatpush1.bf16.msra.mxu0 %v681
        %724 = vmatprep.subr.bf16.mxu0 0
        %725 = vmatpush1.bf16.msra.mxu0 0
        %726 = vmatprep.subr.bf16.mxu0 0
        %727 = vmatpush1.bf16.msra.mxu0 0
        %728 = vmatprep.subr.bf16.mxu0 0
        %729 = vmatpush1.bf16.msra.mxu0 0
        %730 = vmatprep.subr.bf16.mxu0 0
        %731 = vmatpush1.bf16.msra.mxu0 0
        %732 = vmatprep.subr.bf16.mxu0 0
        %733 = vmatpush1.bf16.msra.mxu0 0
        %734 = vmatprep.subr.bf16.mxu0 0
        %735 = vmatpush1.bf16.msra.mxu0 0
        %736 = vmatprep.subr.bf16.mxu0 0
        %737 = vmatpush1.bf16.msra.mxu0 0
        %738 = vmatprep.subr.bf16.mxu0 0
        %739 = vmatpush1.bf16.msra.mxu0 0
        %740 = vmatprep.mubr.bf16.mxu0 0
        %741 = vmatmul.mubr.bf16.gmra.mrb[0].mxu0 %v530
        %v742 = vpop.f32.mrb[0].mxu0
        %v743 = vadd.f32 %v568, %v742
        %v744 = vpop.f32.mrb[0].mxu0
        %v745 = vadd.f32 %v572, %v744
        %v746 = vpop.f32.mrb[0].mxu0
        %v747 = vpop.f32.mrb[0].mxu0
        %748 = vdwg.mxu0
        %749 = vmatprep.subr.bf16.mxu0 0
        %750 = vmatpush1.bf16.msra.mxu0 %v662
        %751 = vmatprep.subr.bf16.mxu0 0
        %752 = vmatpush1.bf16.msra.mxu0 %v665
        %753 = vmatprep.subr.bf16.mxu0 0
        %754 = vmatpush1.bf16.msra.mxu0 %v668
        %755 = vmatprep.subr.bf16.mxu0 0
        %756 = vmatpush1.bf16.msra.mxu0 %v671
        %757 = vmatprep.subr.bf16.mxu0 0
        %758 = vmatpush1.bf16.msra.mxu0 %v674
        %759 = vmatprep.subr.bf16.mxu0 0
        %760 = vmatpush1.bf16.msra.mxu0 %v677
        %761 = vmatprep.subr.bf16.mxu0 0
        %762 = vmatpush1.bf16.msra.mxu0 %v680
        %763 = vmatprep.subr.bf16.mxu0 0
        %764 = vmatpush1.bf16.msra.mxu0 %v683
        %765 = vmatprep.subr.bf16.mxu0 0
        %766 = vmatpush1.bf16.msra.mxu0 0
        %767 = vmatprep.subr.bf16.mxu0 0
        %768 = vmatpush1.bf16.msra.mxu0 0
        %769 = vmatprep.subr.bf16.mxu0 0
        %770 = vmatpush1.bf16.msra.mxu0 0
        %771 = vmatprep.subr.bf16.mxu0 0
        %772 = vmatpush1.bf16.msra.mxu0 0
        %773 = vmatprep.subr.bf16.mxu0 0
        %774 = vmatpush1.bf16.msra.mxu0 0
        %775 = vmatprep.subr.bf16.mxu0 0
        %776 = vmatpush1.bf16.msra.mxu0 0
        %777 = vmatprep.subr.bf16.mxu0 0
        %778 = vmatpush1.bf16.msra.mxu0 0
        %779 = vmatprep.subr.bf16.mxu0 0
        %780 = vmatpush1.bf16.msra.mxu0 0
        %781 = vmatprep.mubr.bf16.mxu0 0
        %782 = vmatmul.mubr.bf16.gmra.mrb[0].mxu0 %v530
        %v783 = vpop.f32.mrb[0].mxu0
        %v784 = vadd.f32 %v576, %v783
        %v785 = vpop.f32.mrb[0].mxu0
        %v786 = vpop.f32.mrb[0].mxu0
        %v787 = vpop.f32.mrb[0].mxu0
        %788 = vdwg.mxu0
        %v789 = vlaneseq
        %v790 = vshrl.u32 %v789, 7
        %v791 = vmul.u32 %v790, 7
        %vm792 = vcmp.ge.s32.totalorder %v497, %v791
        %v793 = vadd.s32 %v791, 7
        %vm794 = vcmp.lt.s32.totalorder %v497, %v793
        %vm795 = vmand %vm792, %vm794
        %v796 = vsel %vm795, 1, 0
        %v797 = vcvt.s32.f32 %v796
        %v799 = vcombine.high %v797, %v797
        %v801 = vunpack.c.l.s4 1966171168
        %v802 = vunpack.c.0.s8 %v801
        %v803 = vlaneseq
        %v804 = vshrl.u32 %v803, 7
        %v805 = vsub.s32 %v802, %v804
        %v806 = vrot.slane %v797, %v805
        %v808 = vunpack.c.l.s4 1966171168
        %v809 = vunpack.c.0.s8 %v808
        %v810 = vlaneseq
        %v811 = vshrl.u32 %v810, 7
        %v812 = vsub.s32 %v809, %v811
        %v813 = vrot.slane %v799, %v812
        %v814 = vcombine.high %v806, %v806
        %v815 = vcombine.high %v813, %v813
        %v817 = vunpack.c.l.s4 1966171168
        %v818 = vunpack.c.0.s8 %v817
        %v819 = vlaneseq
        %v820 = vshrl.u32 %v819, 7
        %v821 = vsub.s32 %v818, %v820
        %v822 = vrot.slane %v806, %v821
        %v824 = vunpack.c.l.s4 1966171168
        %v825 = vunpack.c.0.s8 %v824
        %v826 = vlaneseq
        %v827 = vshrl.u32 %v826, 7
        %v828 = vsub.s32 %v825, %v827
        %v829 = vrot.slane %v813, %v828
        %v831 = vunpack.c.l.s4 1966171168
        %v832 = vunpack.c.0.s8 %v831
        %v833 = vlaneseq
        %v834 = vshrl.u32 %v833, 7
        %v835 = vsub.s32 %v832, %v834
        %v836 = vrot.slane %v814, %v835
        %v838 = vunpack.c.l.s4 1966171168
        %v839 = vunpack.c.0.s8 %v838
        %v840 = vlaneseq
        %v841 = vshrl.u32 %v840, 7
        %v842 = vsub.s32 %v839, %v841
        %v843 = vrot.slane %v815, %v842
        %v844 = vcombine.high %v822, %v822
        %v845 = vcombine.high %v829, %v829
        %v846 = vcombine.high %v836, %v836
        %v847 = vlaneseq
        %v848 = vshrl.u32 %v847, 7
        %v849 = vsub.s32 0, %v848
        %v850 = vrot.slane %v822, %v849
        %v851 = vlaneseq
        %v852 = vshrl.u32 %v851, 7
        %v853 = vsub.s32 0, %v852
        %v854 = vrot.slane %v836, %v853
        %v855 = vlaneseq
        %v856 = vshrl.u32 %v855, 7
        %v857 = vsub.s32 0, %v856
        %v858 = vrot.slane %v844, %v857
        %v859 = vlaneseq
        %v860 = vshrl.u32 %v859, 7
        %v861 = vsub.s32 0, %v860
        %v862 = vrot.slane %v846, %v861
        %v863 = vlaneseq
        %v864 = vshrl.u32 %v863, 7
        %v865 = vsub.s32 0, %v864
        %v866 = vrot.slane %v829, %v865
        %v867 = vlaneseq
        %v868 = vshrl.u32 %v867, 7
        %v869 = vsub.s32 0, %v868
        %v870 = vrot.slane %v843, %v869
        %v871 = vlaneseq
        %v872 = vshrl.u32 %v871, 7
        %v873 = vsub.s32 0, %v872
        %v874 = vrot.slane %v845, %v873
        %v882 = vmul.f32 %v743, %v850
        %v883 = vmul.f32 %v743, %v854
        %v884 = vmul.f32 %v743, %v858
        %v885 = vmul.f32 %v743, %v862
        %v886 = vmul.f32 %v743, %v866
        %v887 = vmul.f32 %v743, %v870
        %v888 = vmul.f32 %v743, %v874
        %889 = vmatprep.subr.mxu0 0.0
        %890 = vmatpush1.xpose.msra.mxu0 %v745
        %891 = vmatprep.subr.mxu0 0.0
        %892 = vmatpush1.xpose.msra.mxu0 0.0
        %893 = vmatprep.subr.mxu0 0.0
        %894 = vmatpush1.xpose.msra.mxu0 0.0
        %895 = vmatprep.subr.mxu0 0.0
        %896 = vmatpush1.xpose.msra.mxu0 0.0
        %897 = vmatprep.subr.mxu0 0.0
        %898 = vmatpush1.xpose.msra.mxu0 0.0
        %899 = vmatprep.subr.mxu0 0.0
        %900 = vmatpush1.xpose.msra.mxu0 0.0
        %901 = vmatprep.subr.mxu0 0.0
        %902 = vmatpush1.xpose.msra.mxu0 0.0
        %903 = vmatprep.subr.mxu0 0.0
        %904 = vmatpush1.xpose.msra.mxu0 0.0
        %905 = vmatprep.subr.mxu0 0.0
        %906 = vmatpush1.xpose.msra.mxu0 0.0
        %907 = vmatprep.subr.mxu0 0.0
        %908 = vmatpush1.xpose.msra.mxu0 0.0
        %909 = vmatprep.subr.mxu0 0.0
        %910 = vmatpush1.xpose.msra.mxu0 0.0
        %911 = vmatprep.subr.mxu0 0.0
        %912 = vmatpush1.xpose.msra.mxu0 0.0
        %913 = vmatprep.subr.mxu0 0.0
        %914 = vmatpush1.xpose.msra.mxu0 0.0
        %915 = vmatprep.subr.mxu0 0.0
        %916 = vmatpush1.xpose.msra.mxu0 0.0
        %917 = vmatprep.subr.mxu0 0.0
        %918 = vmatpush1.xpose.msra.mxu0 0.0
        %919 = vmatprep.subr.mxu0 0.0
        %920 = vmatpush1.xpose.msra.mxu0 0.0
        %921 = vmatprep.subr.mxu0 0.0
        %922 = vmatpush1.xpose.msra.mxu0 0.0
        %923 = vmatprep.subr.mxu0 0.0
        %924 = vmatpush1.xpose.msra.mxu0 0.0
        %925 = vmatprep.subr.mxu0 0.0
        %926 = vmatpush1.xpose.msra.mxu0 0.0
        %927 = vmatprep.subr.mxu0 0.0
        %928 = vmatpush1.xpose.msra.mxu0 0.0
        %929 = vmatprep.subr.mxu0 0.0
        %930 = vmatpush1.xpose.msra.mxu0 0.0
        %931 = vmatprep.subr.mxu0 0.0
        %932 = vmatpush1.xpose.msra.mxu0 0.0
        %933 = vmatprep.subr.mxu0 0.0
        %934 = vmatpush1.xpose.msra.mxu0 0.0
        %935 = vmatprep.subr.mxu0 0.0
        %936 = vmatpush1.xpose.msra.mxu0 0.0
        %937 = vmatprep.subr.mxu0 0.0
        %938 = vmatpush1.xpose.msra.mxu0 0.0
        %939 = vmatprep.subr.mxu0 0.0
        %940 = vmatpush1.xpose.msra.mxu0 0.0
        %941 = vmatprep.subr.mxu0 0.0
        %942 = vmatpush1.xpose.msra.mxu0 0.0
        %943 = vmatprep.subr.mxu0 0.0
        %944 = vmatpush1.xpose.msra.mxu0 0.0
        %945 = vmatprep.subr.mxu0 0.0
        %946 = vmatpush1.xpose.msra.mxu0 0.0
        %947 = vmatprep.subr.mxu0 0.0
        %948 = vmatpush1.xpose.msra.mxu0 0.0
        %949 = vmatprep.subr.mxu0 0.0
        %950 = vmatpush1.xpose.msra.mxu0 0.0
        %951 = vmatprep.subr.mxu0 0.0
        %952 = vmatpush1.xpose.msra.mxu0 0.0
        %953 = vmatprep.mubr.f32.mxu0 0.0
        %954 = vmatmul.mubr.f32.gmra.mrb[0].mxu0 %v882
        %v955 = vpop.f32.mrb[0].mxu0
        %v956 = vadd.f32 0.0, %v955
        %v957 = vpop.f32.mrb[0].mxu0
        %958 = vmatprep.mubr.f32.mxu0 0.0
        %959 = vmatmul.mubr.f32.gmra.mrb[0].mxu0 %v883
        %v960 = vpop.f32.mrb[0].mxu0
        %v961 = vadd.f32 0.0, %v960
        %v962 = vpop.f32.mrb[0].mxu0
        %963 = vmatprep.mubr.f32.mxu0 0.0
        %964 = vmatmul.mubr.f32.gmra.mrb[0].mxu0 %v884
        %v965 = vpop.f32.mrb[0].mxu0
        %v966 = vadd.f32 0.0, %v965
        %v967 = vpop.f32.mrb[0].mxu0
        %968 = vmatprep.mubr.f32.mxu0 0.0
        %969 = vmatmul.mubr.f32.gmra.mrb[0].mxu0 %v885
        %v970 = vpop.f32.mrb[0].mxu0
        %v971 = vadd.f32 0.0, %v970
        %v972 = vpop.f32.mrb[0].mxu0
        %973 = vmatprep.mubr.f32.mxu0 0.0
        %974 = vmatmul.mubr.f32.gmra.mrb[0].mxu0 %v886
        %v975 = vpop.f32.mrb[0].mxu0
        %v976 = vadd.f32 0.0, %v975
        %v977 = vpop.f32.mrb[0].mxu0
        %978 = vmatprep.mubr.f32.mxu0 0.0
        %979 = vmatmul.mubr.f32.gmra.mrb[0].mxu0 %v887
        %v980 = vpop.f32.mrb[0].mxu0
        %v981 = vadd.f32 0.0, %v980
        %v982 = vpop.f32.mrb[0].mxu0
        %983 = vmatprep.mubr.f32.mxu0 0.0
        %984 = vmatmul.mubr.f32.gmra.mrb[0].mxu0 %v888
        %v985 = vpop.f32.mrb[0].mxu0
        %v986 = vadd.f32 0.0, %v985
        %v987 = vpop.f32.mrb[0].mxu0
        %988 = vdwg.mxu0
        %vm989 = vcmask 64512
        %v990 = vsel %vm989, %v956, -inf
        %991 = vmax.xlane.f32.xlu0 %v990
        %v992 = vpop.xlane.xlu0 %991
        %v993 = vsel %vm989, %v961, -inf
        %994 = vmax.xlane.f32.xlu0 %v993
        %v995 = vpop.xlane.xlu0 %994
        %v996 = vsel %vm989, %v966, -inf
        %997 = vmax.xlane.f32.xlu0 %v996
        %v998 = vpop.xlane.xlu0 %997
        %v999 = vsel %vm989, %v971, -inf
        %1000 = vmax.xlane.f32.xlu0 %v999
        %v1001 = vpop.xlane.xlu0 %1000
        %v1002 = vsel %vm989, %v976, -inf
        %1003 = vmax.xlane.f32.xlu0 %v1002
        %v1004 = vpop.xlane.xlu0 %1003
        %v1005 = vsel %vm989, %v981, -inf
        %1006 = vmax.xlane.f32.xlu0 %v1005
        %v1007 = vpop.xlane.xlu0 %1006
        %v1008 = vsel %vm989, %v986, -inf
        %1009 = vmax.xlane.f32.xlu0 %v1008
        %v1010 = vpop.xlane.xlu0 %1009
        %v1011 = vsub.f32 %v956, %v992
        %v1012 = vsub.f32 %v961, %v995
        %v1013 = vsub.f32 %v966, %v998
        %v1014 = vsub.f32 %v971, %v1001
        %v1015 = vsub.f32 %v976, %v1004
        %v1016 = vsub.f32 %v981, %v1007
        %v1017 = vsub.f32 %v986, %v1010
        %v1018 = vmul.f32 %v1011, 1.442695
        %v1019 = vpow.pop %v1018
        %v1020 = vmul.f32 %v1012, 1.442695
        %v1021 = vpow.pop %v1020
        %v1022 = vmul.f32 %v1013, 1.442695
        %v1023 = vpow.pop %v1022
        %v1024 = vmul.f32 %v1014, 1.442695
        %v1025 = vpow.pop %v1024
        %v1026 = vmul.f32 %v1015, 1.442695
        %v1027 = vpow.pop %v1026
        %v1028 = vmul.f32 %v1016, 1.442695
        %v1029 = vpow.pop %v1028
        %v1030 = vmul.f32 %v1017, 1.442695
        %v1031 = vpow.pop %v1030
        %v1032 = vsel %vm989, %v1019, 0.0
        %1033 = vadd.xlane.f32.xlu0 %v1032
        %v1034 = vpop.xlane.xlu0 %1033
        %v1035 = vsel %vm989, %v1021, 0.0
        %1036 = vadd.xlane.f32.xlu0 %v1035
        %v1037 = vpop.xlane.xlu0 %1036
        %v1038 = vsel %vm989, %v1023, 0.0
        %1039 = vadd.xlane.f32.xlu0 %v1038
        %v1040 = vpop.xlane.xlu0 %1039
        %v1041 = vsel %vm989, %v1025, 0.0
        %1042 = vadd.xlane.f32.xlu0 %v1041
        %v1043 = vpop.xlane.xlu0 %1042
        %v1044 = vsel %vm989, %v1027, 0.0
        %1045 = vadd.xlane.f32.xlu0 %v1044
        %v1046 = vpop.xlane.xlu0 %1045
        %v1047 = vsel %vm989, %v1029, 0.0
        %1048 = vadd.xlane.f32.xlu0 %v1047
        %v1049 = vpop.xlane.xlu0 %1048
        %v1050 = vsel %vm989, %v1031, 0.0
        %1051 = vadd.xlane.f32.xlu0 %v1050
        %v1052 = vpop.xlane.xlu0 %1051
        %v1053 = vrcp.pop %v1034
        %v1054 = vrcp.pop %v1037
        %v1055 = vrcp.pop %v1040
        %v1056 = vrcp.pop %v1043
        %v1057 = vrcp.pop %v1046
        %v1058 = vrcp.pop %v1049
        %v1059 = vrcp.pop %v1052
        %v1060 = vmul.f32 %v1019, %v1053
        %v1061 = vmul.f32 %v1021, %v1054
        %v1062 = vmul.f32 %v1023, %v1055
        %v1063 = vmul.f32 %v1025, %v1056
        %v1064 = vmul.f32 %v1027, %v1057
        %v1065 = vmul.f32 %v1029, %v1058
        %v1066 = vmul.f32 %v1031, %v1059
        %v1068 = vsel %vm989, %v1060, 0
        %v1071 = vsel %vm989, %v1061, 0
        %v1074 = vsel %vm989, %v1062, 0
        %v1077 = vsel %vm989, %v1063, 0
        %v1080 = vsel %vm989, %v1064, 0
        %v1083 = vsel %vm989, %v1065, 0
        %v1086 = vsel %vm989, %v1066, 0
        %1088 = vmatprep.subr.mxu0 0.0
        %1089 = vmatpush1.msra.mxu0 %v784
        %1090 = vmatprep.subr.mxu0 0.0
        %1091 = vmatpush1.msra.mxu0 0.0
        %1092 = vmatprep.subr.mxu0 0.0
        %1093 = vmatpush1.msra.mxu0 0.0
        %1094 = vmatprep.subr.mxu0 0.0
        %1095 = vmatpush1.msra.mxu0 0.0
        %1096 = vmatprep.subr.mxu0 0.0
        %1097 = vmatpush1.msra.mxu0 0.0
        %1098 = vmatprep.subr.mxu0 0.0
        %1099 = vmatpush1.msra.mxu0 0.0
        %1100 = vmatprep.subr.mxu0 0.0
        %1101 = vmatpush1.msra.mxu0 0.0
        %1102 = vmatprep.subr.mxu0 0.0
        %1103 = vmatpush1.msra.mxu0 0.0
        %1104 = vmatprep.subr.mxu0 0.0
        %1105 = vmatpush1.msra.mxu0 0.0
        %1106 = vmatprep.subr.mxu0 0.0
        %1107 = vmatpush1.msra.mxu0 0.0
        %1108 = vmatprep.subr.mxu0 0.0
        %1109 = vmatpush1.msra.mxu0 0.0
        %1110 = vmatprep.subr.mxu0 0.0
        %1111 = vmatpush1.msra.mxu0 0.0
        %1112 = vmatprep.subr.mxu0 0.0
        %1113 = vmatpush1.msra.mxu0 0.0
        %1114 = vmatprep.subr.mxu0 0.0
        %1115 = vmatpush1.msra.mxu0 0.0
        %1116 = vmatprep.subr.mxu0 0.0
        %1117 = vmatpush1.msra.mxu0 0.0
        %1118 = vmatprep.subr.mxu0 0.0
        %1119 = vmatpush1.msra.mxu0 0.0
        %1120 = vmatprep.subr.mxu0 0.0
        %1121 = vmatpush1.msra.mxu0 0.0
        %1122 = vmatprep.subr.mxu0 0.0
        %1123 = vmatpush1.msra.mxu0 0.0
        %1124 = vmatprep.subr.mxu0 0.0
        %1125 = vmatpush1.msra.mxu0 0.0
        %1126 = vmatprep.subr.mxu0 0.0
        %1127 = vmatpush1.msra.mxu0 0.0
        %1128 = vmatprep.subr.mxu0 0.0
        %1129 = vmatpush1.msra.mxu0 0.0
        %1130 = vmatprep.subr.mxu0 0.0
        %1131 = vmatpush1.msra.mxu0 0.0
        %1132 = vmatprep.subr.mxu0 0.0
        %1133 = vmatpush1.msra.mxu0 0.0
        %1134 = vmatprep.subr.mxu0 0.0
        %1135 = vmatpush1.msra.mxu0 0.0
        %1136 = vmatprep.subr.mxu0 0.0
        %1137 = vmatpush1.msra.mxu0 0.0
        %1138 = vmatprep.subr.mxu0 0.0
        %1139 = vmatpush1.msra.mxu0 0.0
        %1140 = vmatprep.subr.mxu0 0.0
        %1141 = vmatpush1.msra.mxu0 0.0
        %1142 = vmatprep.subr.mxu0 0.0
        %1143 = vmatpush1.msra.mxu0 0.0
        %1144 = vmatprep.subr.mxu0 0.0
        %1145 = vmatpush1.msra.mxu0 0.0
        %1146 = vmatprep.subr.mxu0 0.0
        %1147 = vmatpush1.msra.mxu0 0.0
        %1148 = vmatprep.subr.mxu0 0.0
        %1149 = vmatpush1.msra.mxu0 0.0
        %1150 = vmatprep.subr.mxu0 0.0
        %1151 = vmatpush1.msra.mxu0 0.0
        %1152 = vmatprep.mubr.f32.mxu0 0.0
        %1153 = vmatmul.mubr.f32.gmra.mrb[0].mxu0 %v1068
        %v1154 = vpop.f32.mrb[0].mxu0
        %v1155 = vadd.f32 0.0, %v1154
        %v1156 = vpop.f32.mrb[0].mxu0
        %1157 = vmatprep.mubr.f32.mxu0 0.0
        %1158 = vmatmul.mubr.f32.gmra.mrb[0].mxu0 %v1071
        %v1159 = vpop.f32.mrb[0].mxu0
        %v1160 = vadd.f32 0.0, %v1159
        %v1161 = vpop.f32.mrb[0].mxu0
        %1162 = vmatprep.mubr.f32.mxu0 0.0
        %1163 = vmatmul.mubr.f32.gmra.mrb[0].mxu0 %v1074
        %v1164 = vpop.f32.mrb[0].mxu0
        %v1165 = vadd.f32 0.0, %v1164
        %v1166 = vpop.f32.mrb[0].mxu0
        %1167 = vmatprep.mubr.f32.mxu0 0.0
        %1168 = vmatmul.mubr.f32.gmra.mrb[0].mxu0 %v1077
        %v1169 = vpop.f32.mrb[0].mxu0
        %v1170 = vadd.f32 0.0, %v1169
        %v1171 = vpop.f32.mrb[0].mxu0
        %1172 = vmatprep.mubr.f32.mxu0 0.0
        %1173 = vmatmul.mubr.f32.gmra.mrb[0].mxu0 %v1080
        %v1174 = vpop.f32.mrb[0].mxu0
        %v1175 = vadd.f32 0.0, %v1174
        %v1176 = vpop.f32.mrb[0].mxu0
        %1177 = vmatprep.mubr.f32.mxu0 0.0
        %1178 = vmatmul.mubr.f32.gmra.mrb[0].mxu0 %v1083
        %v1179 = vpop.f32.mrb[0].mxu0
        %v1180 = vadd.f32 0.0, %v1179
        %v1181 = vpop.f32.mrb[0].mxu0
        %1182 = vmatprep.mubr.f32.mxu0 0.0
        %1183 = vmatmul.mubr.f32.gmra.mrb[0].mxu0 %v1086
        %v1184 = vpop.f32.mrb[0].mxu0
        %v1185 = vadd.f32 0.0, %v1184
        %v1186 = vpop.f32.mrb[0].mxu0
        %1187 = vdwg.mxu0
        %v1188 = vmul.f32 %v1155, %v850
        %v1189 = vmul.f32 %v1160, %v854
        %v1190 = vmul.f32 %v1165, %v858
        %v1191 = vmul.f32 %v1170, %v862
        %v1192 = vmul.f32 %v1175, %v866
        %v1193 = vmul.f32 %v1180, %v870
        %v1194 = vmul.f32 %v1185, %v874
        %v1195 = vadd.f32 %v1188, %v1189
        %v1196 = vadd.f32 %v1195, %v1190
        %v1197 = vadd.f32 %v1196, %v1191
        %v1198 = vadd.f32 %v1197, %v1192
        %v1199 = vadd.f32 %v1198, %v1193
        %v1200 = vadd.f32 %v1199, %v1194
        %v1201 = vpack.c.bf16 %v1200, %v1200
        %v1202 = vld [vmem:[#allocation5] sm:$0xf]
        %v1203 = vld [vmem:[#allocation5 + $0x4] sm:$0xf]
        %v1204 = vld [vmem:[#allocation5 + $0x8] sm:$0xf]
        %v1205 = vld [vmem:[#allocation5 + $0xc] sm:$0xf]
        %v1206 = vld [vmem:[#allocation5 + $0x10] sm:$0xf]
        %v1207 = vld [vmem:[#allocation5 + $0x14] sm:$0xf]
        %v1208 = vld [vmem:[#allocation5 + $0x18] sm:$0xf]
        %v1209 = vld [vmem:[#allocation5 + $0x1c] sm:$0xf]
        %v1210 = vld [vmem:[#allocation5 + $0x20] sm:$0xf]
        %v1211 = vld [vmem:[#allocation5 + $0x24] sm:$0xf]
        %v1212 = vld [vmem:[#allocation5 + $0x28] sm:$0xf]
        %v1213 = vld [vmem:[#allocation5 + $0x2c] sm:$0xf]
        %v1214 = vld [vmem:[#allocation5 + $0x30] sm:$0xf]
        %v1215 = vld [vmem:[#allocation5 + $0x34] sm:$0xf]
        %v1216 = vld [vmem:[#allocation5 + $0x38] sm:$0xf]
        %v1217 = vld [vmem:[#allocation5 + $0x3c] sm:$0xf]
        %v1218 = vld [vmem:[%s6] sm:$0x1]
        %v1220 = vlaneseq
        %v1221 = vshrl.u32 %v1220, 7
        %v1222 = vsub.s32 0, %v1221
        %v1223 = vrot.slane %v1218, %v1222
        %v1241 = vunpack.c.l.b16 %v1202
        %v1242 = vunpack.c.l.b16 %v1203
        %v1243 = vunpack.c.l.b16 %v1204
        %v1244 = vunpack.c.l.b16 %v1205
        %v1245 = vunpack.c.l.b16 %v1206
        %v1246 = vunpack.c.l.b16 %v1207
        %v1247 = vunpack.c.l.b16 %v1208
        %v1248 = vunpack.c.l.b16 %v1209
        %v1249 = vunpack.c.l.b16 %v1210
        %v1250 = vunpack.c.l.b16 %v1211
        %v1251 = vunpack.c.l.b16 %v1212
        %v1252 = vunpack.c.l.b16 %v1213
        %v1253 = vunpack.c.l.b16 %v1214
        %v1254 = vunpack.c.l.b16 %v1215
        %v1255 = vunpack.c.l.b16 %v1216
        %v1256 = vunpack.c.l.b16 %v1217
        %v1257 = vpack.c.b16 %v1242, %v1241
        %v1258 = vpack.c.b16 %v1244, %v1243
        %v1259 = vpack.c.b16 %v1246, %v1245
        %v1260 = vpack.c.b16 %v1248, %v1247
        %v1261 = vpack.c.b16 %v1250, %v1249
        %v1262 = vpack.c.b16 %v1252, %v1251
        %v1263 = vpack.c.b16 %v1254, %v1253
        %v1264 = vpack.c.b16 %v1256, %v1255
        %1273 = vmatprep.subr.bf16.mxu0 0
        %1274 = vmatpush1.bf16.msra.mxu0 %v1257
        %1275 = vmatprep.subr.bf16.mxu0 0
        %1276 = vmatpush1.bf16.msra.mxu0 %v1258
        %1277 = vmatprep.subr.bf16.mxu0 0
        %1278 = vmatpush1.bf16.msra.mxu0 %v1259
        %1279 = vmatprep.subr.bf16.mxu0 0
        %1280 = vmatpush1.bf16.msra.mxu0 %v1260
        %1281 = vmatprep.subr.bf16.mxu0 0
        %1282 = vmatpush1.bf16.msra.mxu0 %v1261
        %1283 = vmatprep.subr.bf16.mxu0 0
        %1284 = vmatpush1.bf16.msra.mxu0 %v1262
        %1285 = vmatprep.subr.bf16.mxu0 0
        %1286 = vmatpush1.bf16.msra.mxu0 %v1263
        %1287 = vmatprep.subr.bf16.mxu0 0
        %1288 = vmatpush1.bf16.msra.mxu0 %v1264
        %1289 = vmatprep.subr.bf16.mxu0 0
        %1290 = vmatpush1.bf16.msra.mxu0 0
        %1291 = vmatprep.subr.bf16.mxu0 0
        %1292 = vmatpush1.bf16.msra.mxu0 0
        %1293 = vmatprep.subr.bf16.mxu0 0
        %1294 = vmatpush1.bf16.msra.mxu0 0
        %1295 = vmatprep.subr.bf16.mxu0 0
        %1296 = vmatpush1.bf16.msra.mxu0 0
        %1297 = vmatprep.subr.bf16.mxu0 0
        %1298 = vmatpush1.bf16.msra.mxu0 0
        %1299 = vmatprep.subr.bf16.mxu0 0
        %1300 = vmatpush1.bf16.msra.mxu0 0
        %1301 = vmatprep.subr.bf16.mxu0 0
        %1302 = vmatpush1.bf16.msra.mxu0 0
        %1303 = vmatprep.subr.bf16.mxu0 0
        %1304 = vmatpush1.bf16.msra.mxu0 0
        %1305 = vmatprep.mubr.bf16.mxu0 0
        %1306 = vmatmul.mubr.bf16.gmra.mrb[0].mxu0 %v1201
        %v1307 = vpop.f32.mrb[0].mxu0
        %v1308 = vadd.f32 %v1223, %v1307
        %v1309 = vpop.f32.mrb[0].mxu0
        %v1310 = vpop.f32.mrb[0].mxu0
        %v1311 = vpop.f32.mrb[0].mxu0
        %1312 = vdwg.mxu0
        %v1313 = vadd.f32 %v1308, %v501
        %v1314 = vld [vmem:[%s7] sm:$0x1]
        %v1315 = vld [vmem:[%s8] sm:$0x1]
        %1316 = vadd.xlane.f32.xlu0 %v1313
        %v1317 = vpop.xlane.xlu0 %1316
        %v1318 = vmul.f32 %v1317, 0.020408163
        %v1319 = vsub.f32 %v1313, %v1318
        %v1320 = vmul.f32 %v1319, %v500
        %v1321 = vmul.f32 %v1320, %v1320
        %1322 = vadd.xlane.f32.xlu0 %v1321
        %v1323 = vpop.xlane.xlu0 %1322
        %v1324 = vmul.f32 %v1323, 0.020408163
        %v1325 = vadd.f32 %v1324, 1e-05
        %v1326 = vrsqrt.pop %v1325
        %v1327 = vmul.f32 %v1320, %v1326
        %v1329 = vlaneseq
        %v1330 = vshrl.u32 %v1329, 7
        %v1331 = vsub.s32 0, %v1330
        %v1332 = vrot.slane %v1314, %v1331
        %v1334 = vmul.f32 %v1327, %v1332
        %v1336 = vlaneseq
        %v1337 = vshrl.u32 %v1336, 7
        %v1338 = vsub.s32 0, %v1337
        %v1339 = vrot.slane %v1315, %v1338
        %v1341 = vadd.f32 %v1334, %v1339
        %v1342 = vpack.c.bf16 %v1341, %v1341
        %v1343 = vld [vmem:[#allocation7] sm:$0xff]
        %v1344 = vld [vmem:[#allocation7 + $0x8] sm:$0xff]
        %v1345 = vld [vmem:[#allocation7 + $0x10] sm:$0xff]
        %v1346 = vld [vmem:[#allocation7 + $0x18] sm:$0xff]
        %v1347 = vld [vmem:[#allocation7 + $0x20] sm:$0xff]
        %v1348 = vld [vmem:[#allocation7 + $0x28] sm:$0xff]
        %v1349 = vld [vmem:[#allocation7 + $0x30] sm:$0xff]
        %v1350 = vld [vmem:[#allocation7 + $0x38] sm:$0xff]
        %v1351 = vld [vmem:[#allocation7 + $0x40] sm:$0xff]
        %v1352 = vld [vmem:[#allocation7 + $0x48] sm:$0xff]
        %v1353 = vld [vmem:[#allocation7 + $0x50] sm:$0xff]
        %v1354 = vld [vmem:[#allocation7 + $0x58] sm:$0xff]
        %v1355 = vld [vmem:[#allocation7 + $0x60] sm:$0xff]
        %v1356 = vld [vmem:[#allocation7 + $0x68] sm:$0xff]
        %v1357 = vld [vmem:[#allocation7 + $0x70] sm:$0xff]
        %v1358 = vld [vmem:[#allocation7 + $0x78] sm:$0xff]
        %v1359 = vld [vmem:[%s10] sm:$0x3]
        %v1361 = vlaneseq
        %v1362 = vshrl.u32 %v1361, 7
        %v1363 = vsub.s32 0, %v1362
        %v1364 = vrot.slane %v1359, %v1363
        %v1365 = vlaneseq
        %v1366 = vshrl.u32 %v1365, 7
        %v1367 = vsub.s32 1, %v1366
        %v1368 = vrot.slane %v1359, %v1367
        %v1387 = vunpack.c.l.b16 %v1343
        %v1388 = vunpack.c.h.b16 %v1343
        %v1389 = vunpack.c.l.b16 %v1344
        %v1390 = vunpack.c.h.b16 %v1344
        %v1391 = vunpack.c.l.b16 %v1345
        %v1392 = vunpack.c.h.b16 %v1345
        %v1393 = vunpack.c.l.b16 %v1346
        %v1394 = vunpack.c.h.b16 %v1346
        %v1395 = vunpack.c.l.b16 %v1347
        %v1396 = vunpack.c.h.b16 %v1347
        %v1397 = vunpack.c.l.b16 %v1348
        %v1398 = vunpack.c.h.b16 %v1348
        %v1399 = vunpack.c.l.b16 %v1349
        %v1400 = vunpack.c.h.b16 %v1349
        %v1401 = vunpack.c.l.b16 %v1350
        %v1402 = vunpack.c.h.b16 %v1350
        %v1403 = vunpack.c.l.b16 %v1351
        %v1404 = vunpack.c.h.b16 %v1351
        %v1405 = vunpack.c.l.b16 %v1352
        %v1406 = vunpack.c.h.b16 %v1352
        %v1407 = vunpack.c.l.b16 %v1353
        %v1408 = vunpack.c.h.b16 %v1353
        %v1409 = vunpack.c.l.b16 %v1354
        %v1410 = vunpack.c.h.b16 %v1354
        %v1411 = vunpack.c.l.b16 %v1355
        %v1412 = vunpack.c.h.b16 %v1355
        %v1413 = vunpack.c.l.b16 %v1356
        %v1414 = vunpack.c.h.b16 %v1356
        %v1415 = vunpack.c.l.b16 %v1357
        %v1416 = vunpack.c.h.b16 %v1357
        %v1417 = vunpack.c.l.b16 %v1358
        %v1418 = vunpack.c.h.b16 %v1358
        %v1419 = vpack.c.b16 %v1389, %v1387
        %v1420 = vpack.c.b16 %v1390, %v1388
        %v1421 = vpack.c.b16 %v1393, %v1391
        %v1422 = vpack.c.b16 %v1394, %v1392
        %v1423 = vpack.c.b16 %v1397, %v1395
        %v1424 = vpack.c.b16 %v1398, %v1396
        %v1425 = vpack.c.b16 %v1401, %v1399
        %v1426 = vpack.c.b16 %v1402, %v1400
        %v1427 = vpack.c.b16 %v1405, %v1403
        %v1428 = vpack.c.b16 %v1406, %v1404
        %v1429 = vpack.c.b16 %v1409, %v1407
        %v1430 = vpack.c.b16 %v1410, %v1408
        %v1431 = vpack.c.b16 %v1413, %v1411
        %v1432 = vpack.c.b16 %v1414, %v1412
        %v1433 = vpack.c.b16 %v1417, %v1415
        %v1434 = vpack.c.b16 %v1418, %v1416
        %1451 = vmatprep.subr.bf16.mxu0 %v1420
        %1452 = vmatpush1.bf16.msra.mxu0 %v1419
        %1453 = vmatprep.subr.bf16.mxu0 %v1422
        %1454 = vmatpush1.bf16.msra.mxu0 %v1421
        %1455 = vmatprep.subr.bf16.mxu0 %v1424
        %1456 = vmatpush1.bf16.msra.mxu0 %v1423
        %1457 = vmatprep.subr.bf16.mxu0 %v1426
        %1458 = vmatpush1.bf16.msra.mxu0 %v1425
        %1459 = vmatprep.subr.bf16.mxu0 %v1428
        %1460 = vmatpush1.bf16.msra.mxu0 %v1427
        %1461 = vmatprep.subr.bf16.mxu0 %v1430
        %1462 = vmatpush1.bf16.msra.mxu0 %v1429
        %1463 = vmatprep.subr.bf16.mxu0 %v1432
        %1464 = vmatpush1.bf16.msra.mxu0 %v1431
        %1465 = vmatprep.subr.bf16.mxu0 %v1434
        %1466 = vmatpush1.bf16.msra.mxu0 %v1433
        %1467 = vmatprep.subr.bf16.mxu0 0
        %1468 = vmatpush1.bf16.msra.mxu0 0
        %1469 = vmatprep.subr.bf16.mxu0 0
        %1470 = vmatpush1.bf16.msra.mxu0 0
        %1471 = vmatprep.subr.bf16.mxu0 0
        %1472 = vmatpush1.bf16.msra.mxu0 0
        %1473 = vmatprep.subr.bf16.mxu0 0
        %1474 = vmatpush1.bf16.msra.mxu0 0
        %1475 = vmatprep.subr.bf16.mxu0 0
        %1476 = vmatpush1.bf16.msra.mxu0 0
        %1477 = vmatprep.subr.bf16.mxu0 0
        %1478 = vmatpush1.bf16.msra.mxu0 0
        %1479 = vmatprep.subr.bf16.mxu0 0
        %1480 = vmatpush1.bf16.msra.mxu0 0
        %1481 = vmatprep.subr.bf16.mxu0 0
        %1482 = vmatpush1.bf16.msra.mxu0 0
        %1483 = vmatprep.mubr.bf16.mxu0 0
        %1484 = vmatmul.mubr.bf16.gmra.mrb[0].mxu0 %v1342
        %v1485 = vpop.f32.mrb[0].mxu0
        %v1486 = vadd.f32 %v1364, %v1485
        %v1487 = vpop.f32.mrb[0].mxu0
        %v1488 = vadd.f32 %v1368, %v1487
        %v1489 = vpop.f32.mrb[0].mxu0
        %v1490 = vpop.f32.mrb[0].mxu0
        %1491 = vdwg.mxu0
        %v1492 = vmul.f32 %v1486, 0.5
        %v1493 = vmul.f32 %v1488, 0.5
        %v1494 = vmul.f32 %v1486, 0.044715
        %v1495 = vmul.f32 %v1488, 0.044715
        %v1496 = vmul.f32 %v1494, %v1486
        %v1497 = vmul.f32 %v1495, %v1488
        %v1498 = vmul.f32 %v1496, %v1486
        %v1499 = vmul.f32 %v1497, %v1488
        %v1500 = vadd.f32 %v1486, %v1498
        %v1501 = vadd.f32 %v1488, %v1499
        %v1502 = vmul.f32 %v1500, 0.7978846
        %v1503 = vmul.f32 %v1501, 0.7978846
        %v1504 = vtanh.pop %v1502
        %v1505 = vtanh.pop %v1503
        %v1506 = vadd.f32 %v1504, 1.0
        %v1507 = vadd.f32 %v1505, 1.0
        %v1508 = vmul.f32 %v1492, %v1506
        %v1509 = vmul.f32 %v1493, %v1507
        %v1510 = vpack.c.bf16 %v1508, %v1508
        %v1511 = vpack.c.bf16 %v1509, %v1509
        %v1512 = vld [vmem:[#allocation8] sm:$0xf]
        %v1513 = vld [vmem:[#allocation8 + $0x4] sm:$0xf]
        %v1514 = vld [vmem:[#allocation8 + $0x8] sm:$0xf]
        %v1515 = vld [vmem:[#allocation8 + $0xc] sm:$0xf]
        %v1516 = vld [vmem:[#allocation8 + $0x10] sm:$0xf]
        %v1517 = vld [vmem:[#allocation8 + $0x14] sm:$0xf]
        %v1518 = vld [vmem:[#allocation8 + $0x18] sm:$0xf]
        %v1519 = vld [vmem:[#allocation8 + $0x1c] sm:$0xf]
        %v1520 = vld [vmem:[#allocation8 + $0x20] sm:$0xf]
        %v1521 = vld [vmem:[#allocation8 + $0x24] sm:$0xf]
        %v1522 = vld [vmem:[#allocation8 + $0x28] sm:$0xf]
        %v1523 = vld [vmem:[#allocation8 + $0x2c] sm:$0xf]
        %v1524 = vld [vmem:[#allocation8 + $0x30] sm:$0xf]
        %v1525 = vld [vmem:[#allocation8 + $0x34] sm:$0xf]
        %v1526 = vld [vmem:[#allocation8 + $0x38] sm:$0xf]
        %v1527 = vld [vmem:[#allocation8 + $0x3c] sm:$0xf]
        %v1528 = vld [vmem:[#allocation8 + $0x40] sm:$0xf]
        %v1529 = vld [vmem:[#allocation8 + $0x44] sm:$0xf]
        %v1530 = vld [vmem:[#allocation8 + $0x48] sm:$0xf]
        %v1531 = vld [vmem:[#allocation8 + $0x4c] sm:$0xf]
        %v1532 = vld [vmem:[#allocation8 + $0x50] sm:$0xf]
        %v1533 = vld [vmem:[#allocation8 + $0x54] sm:$0xf]
        %v1534 = vld [vmem:[#allocation8 + $0x58] sm:$0xf]
        %v1535 = vld [vmem:[#allocation8 + $0x5c] sm:$0xf]
        %v1536 = vld [vmem:[#allocation8 + $0x60] sm:$0xf]
        %v1537 = vld [vmem:[#allocation8 + $0x64] sm:$0xf]
        %v1538 = vld [vmem:[#allocation8 + $0x68] sm:$0xf]
        %v1539 = vld [vmem:[#allocation8 + $0x6c] sm:$0xf]
        %v1540 = vld [vmem:[#allocation8 + $0x70] sm:$0xf]
        %v1541 = vld [vmem:[#allocation8 + $0x74] sm:$0xf]
        %v1542 = vld [vmem:[#allocation8 + $0x78] sm:$0xf]
        %v1543 = vld [vmem:[#allocation8 + $0x7c] sm:$0xf]
        %v1544 = vld [vmem:[%s12] sm:$0x1]
        %v1546 = vlaneseq
        %v1547 = vshrl.u32 %v1546, 7
        %v1548 = vsub.s32 0, %v1547
        %v1549 = vrot.slane %v1544, %v1548
        %v1583 = vunpack.c.l.b16 %v1512
        %v1584 = vunpack.c.l.b16 %v1513
        %v1585 = vunpack.c.l.b16 %v1514
        %v1586 = vunpack.c.l.b16 %v1515
        %v1587 = vunpack.c.l.b16 %v1516
        %v1588 = vunpack.c.l.b16 %v1517
        %v1589 = vunpack.c.l.b16 %v1518
        %v1590 = vunpack.c.l.b16 %v1519
        %v1591 = vunpack.c.l.b16 %v1520
        %v1592 = vunpack.c.l.b16 %v1521
        %v1593 = vunpack.c.l.b16 %v1522
        %v1594 = vunpack.c.l.b16 %v1523
        %v1595 = vunpack.c.l.b16 %v1524
        %v1596 = vunpack.c.l.b16 %v1525
        %v1597 = vunpack.c.l.b16 %v1526
        %v1598 = vunpack.c.l.b16 %v1527
        %v1599 = vunpack.c.l.b16 %v1528
        %v1600 = vunpack.c.l.b16 %v1529
        %v1601 = vunpack.c.l.b16 %v1530
        %v1602 = vunpack.c.l.b16 %v1531
        %v1603 = vunpack.c.l.b16 %v1532
        %v1604 = vunpack.c.l.b16 %v1533
        %v1605 = vunpack.c.l.b16 %v1534
        %v1606 = vunpack.c.l.b16 %v1535
        %v1607 = vunpack.c.l.b16 %v1536
        %v1608 = vunpack.c.l.b16 %v1537
        %v1609 = vunpack.c.l.b16 %v1538
        %v1610 = vunpack.c.l.b16 %v1539
        %v1611 = vunpack.c.l.b16 %v1540
        %v1612 = vunpack.c.l.b16 %v1541
        %v1613 = vunpack.c.l.b16 %v1542
        %v1614 = vunpack.c.l.b16 %v1543
        %v1615 = vpack.c.b16 %v1584, %v1583
        %v1616 = vpack.c.b16 %v1586, %v1585
        %v1617 = vpack.c.b16 %v1588, %v1587
        %v1618 = vpack.c.b16 %v1590, %v1589
        %v1619 = vpack.c.b16 %v1592, %v1591
        %v1620 = vpack.c.b16 %v1594, %v1593
        %v1621 = vpack.c.b16 %v1596, %v1595
        %v1622 = vpack.c.b16 %v1598, %v1597
        %v1623 = vpack.c.b16 %v1600, %v1599
        %v1624 = vpack.c.b16 %v1602, %v1601
        %v1625 = vpack.c.b16 %v1604, %v1603
        %v1626 = vpack.c.b16 %v1606, %v1605
        %v1627 = vpack.c.b16 %v1608, %v1607
        %v1628 = vpack.c.b16 %v1610, %v1609
        %v1629 = vpack.c.b16 %v1612, %v1611
        %v1630 = vpack.c.b16 %v1614, %v1613
        %1647 = vmatprep.subr.bf16.mxu0 0
        %1648 = vmatpush1.bf16.msra.mxu0 %v1615
        %1649 = vmatprep.subr.bf16.mxu0 0
        %1650 = vmatpush1.bf16.msra.mxu0 %v1616
        %1651 = vmatprep.subr.bf16.mxu0 0
        %1652 = vmatpush1.bf16.msra.mxu0 %v1617
        %1653 = vmatprep.subr.bf16.mxu0 0
        %1654 = vmatpush1.bf16.msra.mxu0 %v1618
        %1655 = vmatprep.subr.bf16.mxu0 0
        %1656 = vmatpush1.bf16.msra.mxu0 %v1619
        %1657 = vmatprep.subr.bf16.mxu0 0
        %1658 = vmatpush1.bf16.msra.mxu0 %v1620
        %1659 = vmatprep.subr.bf16.mxu0 0
        %1660 = vmatpush1.bf16.msra.mxu0 %v1621
        %1661 = vmatprep.subr.bf16.mxu0 0
        %1662 = vmatpush1.bf16.msra.mxu0 %v1622
        %1663 = vmatprep.subr.bf16.mxu0 0
        %1664 = vmatpush1.bf16.msra.mxu0 %v1623
        %1665 = vmatprep.subr.bf16.mxu0 0
        %1666 = vmatpush1.bf16.msra.mxu0 %v1624
        %1667 = vmatprep.subr.bf16.mxu0 0
        %1668 = vmatpush1.bf16.msra.mxu0 %v1625
        %1669 = vmatprep.subr.bf16.mxu0 0
        %1670 = vmatpush1.bf16.msra.mxu0 %v1626
        %1671 = vmatprep.subr.bf16.mxu0 0
        %1672 = vmatpush1.bf16.msra.mxu0 %v1627
        %1673 = vmatprep.subr.bf16.mxu0 0
        %1674 = vmatpush1.bf16.msra.mxu0 %v1628
        %1675 = vmatprep.subr.bf16.mxu0 0
        %1676 = vmatpush1.bf16.msra.mxu0 %v1629
        %1677 = vmatprep.subr.bf16.mxu0 0
        %1678 = vmatpush1.bf16.msra.mxu0 %v1630
        %1679 = vmatprep.mubr.bf16.mxu0 %v1511
        %1680 = vmatmul.mubr.bf16.gmra.mrb[0].mxu0 %v1510
        %v1681 = vpop.f32.mrb[0].mxu0
        %v1682 = vadd.f32 %v1549, %v1681
        %v1683 = vpop.f32.mrb[0].mxu0
        %v1684 = vpop.f32.mrb[0].mxu0
        %v1685 = vpop.f32.mrb[0].mxu0
        %1686 = vdwg.mxu0
        %v1687 = vadd.f32 %v1682, %v1313
        %1688 = vst [vmem:[%s490] sm:$0xff] %v1687
        %s1689 = sand.u32 %s316, 1
        %s1690 = scalar_lea.sflag [#allocation4], %s1689
        %s1691 = sand.u32 %s316, 1
        %s1692 = smul.addr %s1691, 8
        %s1693 = scalar_lea.vmem [#allocation10], %s1692
        // Predicated region
        $region89: #{_encoder_forward.1} parent=71 // pred_check
          %p1694 = pneg %p326
        $region90: #{_encoder_forward.1} parent=71 // pred_check_branch
          %1696 = sbr.rel (%p1694) target = $region92
        $region91: #{_encoder_forward.1} parent=71 // pred_region
          %s1698 = ssub.s32 128, 128
          %1699 = vsyncadd %s1690, %s1698
          %s1700 = smul.addr %s30, 128
          %s1701 = scalar_lea.hbm %s13, %s1700
          %s1703 = sshll.u32 %s1693, 4
          %s1704 = int_to_ptr.vmem [resolvable:$true] %s1703
          %1706 = dma.vmem_to_hbm [thread:$0]  %s1704, 128, %s1701, %s1690
        $region92: #{_encoder_forward.1} parent=71 // pred_fallthru
          _
      $region72: #{_encoder_forward.1} parent=5 // pred_fallthru
        _
      %p1707 = scmp.le.s32.totalorder 2, %s25
      // Predicated region
      $region93: #{_encoder_forward.1} parent=5 // pred_check
        %p1708 = pneg %p1707
      $region94: #{_encoder_forward.1} parent=5 // pred_check_branch
        %1710 = sbr.rel (%p1708) target = $region96
      $region95: #{_encoder_forward.1} parent=5 // pred_region
        %s1711 = ssub.s32 %s25, 2
        // Predicated region
        $region97: #{_encoder_forward.1} parent=95 // pred_check
          %p1712 = pneg %p332
        $region98: #{_encoder_forward.1} parent=95 // pred_check_branch
          %1714 = sbr.rel (%p1712) target = $region100
        $region99: #{_encoder_forward.1} parent=95 // pred_region
          %s1715 = sand.u32 %s317, 1
          %s1716 = scalar_lea.sflag [#allocation4], %s1715
          %s1717 = sand.u32 %s317, 1
          %s1718 = smul.addr %s1717, 8
          %s1719 = scalar_lea.vmem [#allocation10], %s1718
          %1720 = dma.done %s1716, 128
        $region100: #{_encoder_forward.1} parent=95 // pred_fallthru
          _
      $region96: #{_encoder_forward.1} parent=5 // pred_fallthru
        _
    $region6: #{_encoder_forward.1} parent=1 // loop_footer
      %s29 = sadd.s32 1, %s25
    $region7: #{_encoder_forward.1} parent=1 // loop_footer_branch
      %24 = sbr.rel target = $region3
    $region8: #{_encoder_forward.1} parent=1 // loop_exit
      _
    %1721 = vsyncpa [#allocation3], 1
    %s1722 = scalar_lea.sflag [#allocation3], 1
    %1723 = vsyncpa %s1722, 1
    %1724 = vsyncpa [#allocation6], 1
    %1725 = vsyncpa [#allocation9], 1
    %1726 = vsyncpa [#allocation4], 1
    %s1727 = scalar_lea.sflag [#allocation4], 1
    %1728 = vsyncpa %s1727, 1

</llo_original>
